<compile_context>
chip_gen: v6e
topology: v6e:2x2x1
jax: 0.10.0
libtpu: 0.0.40
codegen_flags: <defaults>
</compile_context>

<pallas_src>
import jax
import jax.numpy as jnp
from jax import lax
from jax.experimental import pallas as pl
from jax.experimental.pallas import tpu as pltpu

# Small, module-consistent sizes (module: input_size=1, output_size=1, 2 layers).
# HIDDEN_SIZE kept at 32 (small, lane-friendly) instead of the module's 100.
INPUT_SIZE = 1
HIDDEN_SIZE = 32
OUTPUT_SIZE = 1
NUM_LAYERS = 2
BATCH = 8
SEQ = 8


def gru_kernel(x_ref,
               w_ih0_ref, w_hh0_ref, b_ih0_ref, b_hh0_ref,
               w_l1_ref, b_l1_ref,
               w_fc_ref, b_fc_ref,
               out_ref,
               gi0_scratch):
    T, B, I = x_ref.shape
    H = w_hh0_ref.shape[0]          # w_hh0 stored transposed: (H, 3H)

    # Hoist weights into values once (they live in VMEM).
    w_hh0 = w_hh0_ref[...]          # (H, 3H)
    w_l1 = w_l1_ref[...]            # (2H, 6H) block-diag [[w_ih1, 0], [0, w_hh1]]

    # Pre-broadcast biases once (JAX doesn't CSE broadcast_in_dim; don't let
    # implicit broadcasting re-materialize these inside the serial loop).
    b_hh0_b = jnp.broadcast_to(b_hh0_ref[...], (B, 3 * H))        # (B, 3H)
    b_l1_b = jnp.broadcast_to(b_l1_ref[...], (B, 6 * H))          # (B, 6H) = [b_ih1 | b_hh1]

    # Layer-0 input projection for ALL timesteps in one matmul, off the
    # serial critical path: (T*B, I) @ (I, 3H) + b_ih0.
    x_all = x_ref[...].reshape(T * B, I)
    gi0_all = (jnp.dot(x_all, w_ih0_ref[...], preferred_element_type=jnp.float32)
               + b_ih0_ref[...])
    gi0_scratch[...] = gi0_all.reshape(T, B, 3 * H)

    def step(t, carry):
        h0, h1 = carry

        # ---- layer 0: gi precomputed, single recurrent matmul ----
        gi0 = gi0_scratch[t]                                       # (B, 3H)
        gh0 = jnp.dot(h0, w_hh0, preferred_element_type=jnp.float32) + b_hh0_b
        r0 = jax.nn.sigmoid(gi0[:, 0:H] + gh0[:, 0:H])
        z0 = jax.nn.sigmoid(gi0[:, H:2 * H] + gh0[:, H:2 * H])
        n0 = jnp.tanh(gi0[:, 2 * H:3 * H] + r0 * gh0[:, 2 * H:3 * H])
        h0 = (1.0 - z0) * n0 + z0 * h0

        # ---- layer 1: one fused matmul  [h0 | h1] @ blockdiag -> [gi1 | gh1] ----
        hcat = jnp.concatenate([h0, h1], axis=-1)                  # (B, 2H)
        g1 = jnp.dot(hcat, w_l1, preferred_element_type=jnp.float32) + b_l1_b
        gi1 = g1[:, 0:3 * H]
        gh1 = g1[:, 3 * H:6 * H]
        r1 = jax.nn.sigmoid(gi1[:, 0:H] + gh1[:, 0:H])
        z1 = jax.nn.sigmoid(gi1[:, H:2 * H] + gh1[:, H:2 * H])
        n1 = jnp.tanh(gi1[:, 2 * H:3 * H] + r1 * gh1[:, 2 * H:3 * H])
        h1 = (1.0 - z1) * n1 + z1 * h1

        return (h0, h1)

    h_init = (jnp.zeros((B, H), jnp.float32), jnp.zeros((B, H), jnp.float32))
    # T is static (8): fully unroll so the scheduler sees across iterations.
    _, h1_last = lax.fori_loop(0, T, step, h_init, unroll=True)

    # Dropout(0.2) in eval mode == identity.
    # TODO(synk): training-mode dropout (stochastic mask) omitted.
    # Final Linear on the VPU/XLU: broadcast-multiply + lane reduce (skips one
    # more MXU round trip for an (B,H)x(H,1) epilogue matmul).
    w_fc_b = jnp.broadcast_to(w_fc_ref[...], (B, H))               # w_fc stored (1, H)
    out_ref[...] = (jnp.sum(h1_last * w_fc_b, axis=-1, keepdims=True)
                    + b_fc_ref[...])


def pack_kernel_params(params):
    """One-time packing of params for the kernel (stacking done here, not in-kernel)."""
    H = params["w_hh0"].shape[0]
    zeros = jnp.zeros((H, 3 * H), jnp.float32)
    # Block-diagonal so [h0 | h1] @ w_l1 = [h0@w_ih1 | h1@w_hh1] (gi1 and gh1
    # stay separate -> the r * gh_n coupling remains exact).
    w_l1 = jnp.concatenate(
        [jnp.concatenate([params["w_ih1"], zeros], axis=-1),
         jnp.concatenate([zeros, params["w_hh1"]], axis=-1)], axis=0)       # (2H, 6H)
    b_l1 = jnp.concatenate([params["b_ih1"], params["b_hh1"]], axis=-1)     # (1, 6H)
    return {
        "w_ih0": params["w_ih0"], "w_hh0": params["w_hh0"],
        "b_ih0": params["b_ih0"], "b_hh0": params["b_hh0"],
        "w_l1": w_l1, "b_l1": b_l1,
        "w_fc_row": params["w_fc"].T,          # (1, H) for the VPU head
        "b_fc": params["b_fc"],                # (1, 1)
    }


def gru_forward(x, packed):
    """x: (B, T, I) batch-first, like the PyTorch module."""
    B, T, I = x.shape
    H = packed["w_hh0"].shape[0]
    x_tm = jnp.transpose(x, (1, 0, 2))  # time-major (T, B, I) for the kernel

    vmem_spec = pl.BlockSpec(memory_space=pltpu.MemorySpace.VMEM)
    kernel_args = (
        x_tm,
        packed["w_ih0"], packed["w_hh0"], packed["b_ih0"], packed["b_hh0"],
        packed["w_l1"], packed["b_l1"],
        packed["w_fc_row"], packed["b_fc"],
    )
    return pl.pallas_call(
        gru_kernel,
        out_shape=jax.ShapeDtypeStruct((B, OUTPUT_SIZE), jnp.float32),
        in_specs=[vmem_spec] * len(kernel_args),
        out_specs=vmem_spec,
        scratch_shapes=[pltpu.VMEM((T, B, 3 * H), jnp.float32)],
    )(*kernel_args)


def init_params(key, input_size, hidden_size, output_size):
    """Deterministic init matching PyTorch shapes; weights stored transposed."""
    H = hidden_size
    bound = 1.0 / jnp.sqrt(jnp.float32(H))
    keys = jax.random.split(key, 12)

    def u(k, shape):
        return jax.random.uniform(k, shape, jnp.float32, -bound, bound)

    return {
        # layer 0: input -> hidden
        "w_ih0": u(keys[0], (input_size, 3 * H)),
        "w_hh0": u(keys[1], (H, 3 * H)),
        "b_ih0": u(keys[2], (1, 3 * H)),
        "b_hh0": u(keys[3], (1, 3 * H)),
        # layer 1: hidden -> hidden
        "w_ih1": u(keys[4], (H, 3 * H)),
        "w_hh1": u(keys[5], (H, 3 * H)),
        "b_ih1": u(keys[6], (1, 3 * H)),
        "b_hh1": u(keys[7], (1, 3 * H)),
        # fc head
        "w_fc": u(keys[8], (H, output_size)),
        "b_fc": u(keys[9], (1, output_size)),
    }


def gru_reference(x, params):
    """Pure-JAX reference of the same forward (unfused math), for validation."""
    H = HIDDEN_SIZE
    B = x.shape[0]

    def cell(x_t, h, w_ih, w_hh, b_ih, b_hh):
        gi = x_t @ w_ih + b_ih
        gh = h @ w_hh + b_hh
        r = jax.nn.sigmoid(gi[:, :H] + gh[:, :H])
        z = jax.nn.sigmoid(gi[:, H:2 * H] + gh[:, H:2 * H])
        n = jnp.tanh(gi[:, 2 * H:] + r * gh[:, 2 * H:])
        return (1.0 - z) * n + z * h

    def scan_fn(carry, x_t):
        h0, h1 = carry
        h0 = cell(x_t, h0, params["w_ih0"], params["w_hh0"],
                  params["b_ih0"], params["b_hh0"])
        h1 = cell(h0, h1, params["w_ih1"], params["w_hh1"],
                  params["b_ih1"], params["b_hh1"])
        return (h0, h1), None

    init = (jnp.zeros((B, H), jnp.float32), jnp.zeros((B, H), jnp.float32))
    (_, h1), _ = lax.scan(scan_fn, init, jnp.transpose(x, (1, 0, 2)))
    return h1 @ params["w_fc"] + params["b_fc"]


if __name__ == "__main__":
    key = jax.random.PRNGKey(0)
    k_x, k_p = jax.random.split(key)

    x = jax.random.normal(k_x, (BATCH, SEQ, INPUT_SIZE), jnp.float32)
    params = init_params(k_p, INPUT_SIZE, HIDDEN_SIZE, OUTPUT_SIZE)
    packed = jax.tree_util.tree_map(jax.block_until_ready, pack_kernel_params(params))

    out = gru_forward(x, packed)
    out = jax.block_until_ready(out)

    ref = jax.block_until_ready(gru_reference(x, params))
    assert out.shape == (BATCH, OUTPUT_SIZE)
    assert jnp.allclose(out, ref, atol=1e-5, rtol=1e-5), "mismatch vs reference"

    print("KERNEL_OK")
</pallas_src>

<mosaic_0001>
module attributes {stable_mosaic.version = 11 : i64} {
  func.func @gru_kernel(%arg0: memref<8x8x1xf32, #tpu.memory_space<vmem>>, %arg1: memref<1x96xf32, #tpu.memory_space<vmem>>, %arg2: memref<32x96xf32, #tpu.memory_space<vmem>>, %arg3: memref<1x96xf32, #tpu.memory_space<vmem>>, %arg4: memref<1x96xf32, #tpu.memory_space<vmem>>, %arg5: memref<64x192xf32, #tpu.memory_space<vmem>>, %arg6: memref<1x192xf32, #tpu.memory_space<vmem>>, %arg7: memref<1x32xf32, #tpu.memory_space<vmem>>, %arg8: memref<1x1xf32, #tpu.memory_space<vmem>>, %arg9: memref<8x1xf32, #tpu.memory_space<vmem>>, %arg10: memref<8x8x96xf32, #tpu.memory_space<vmem>>) attributes {dimension_semantics = [], scalar_prefetch = 0 : i64, scratch_operands = 1 : i64, tpu.core_type = #tpu.core_type<tc>} {
    %c0 = arith.constant 0 : index
    %c0_0 = arith.constant 0 : index
    %0 = vector.load %arg2[%c0, %c0_0] : memref<32x96xf32, #tpu.memory_space<vmem>>, vector<32x96xf32>
    %c0_1 = arith.constant 0 : index
    %c0_2 = arith.constant 0 : index
    %1 = vector.load %arg5[%c0_1, %c0_2] : memref<64x192xf32, #tpu.memory_space<vmem>>, vector<64x192xf32>
    %c0_3 = arith.constant 0 : index
    %c0_4 = arith.constant 0 : index
    %2 = vector.load %arg4[%c0_3, %c0_4] : memref<1x96xf32, #tpu.memory_space<vmem>>, vector<1x96xf32>
    %3 = vector.shape_cast %2 : vector<1x96xf32> to vector<1x96xf32>
    %4 = vector.broadcast %3 : vector<1x96xf32> to vector<8x96xf32>
    %c0_5 = arith.constant 0 : index
    %c0_6 = arith.constant 0 : index
    %5 = vector.load %arg6[%c0_5, %c0_6] : memref<1x192xf32, #tpu.memory_space<vmem>>, vector<1x192xf32>
    %6 = vector.shape_cast %5 : vector<1x192xf32> to vector<1x192xf32>
    %7 = vector.broadcast %6 : vector<1x192xf32> to vector<8x192xf32>
    %c0_7 = arith.constant 0 : index
    %c0_8 = arith.constant 0 : index
    %c0_9 = arith.constant 0 : index
    %8 = vector.load %arg0[%c0_7, %c0_8, %c0_9] : memref<8x8x1xf32, #tpu.memory_space<vmem>>, vector<8x8x1xf32>
    %9 = vector.shape_cast %8 : vector<8x8x1xf32> to vector<64x1xf32>
    %c0_10 = arith.constant 0 : index
    %c0_11 = arith.constant 0 : index
    %10 = vector.load %arg1[%c0_10, %c0_11] : memref<1x96xf32, #tpu.memory_space<vmem>>, vector<1x96xf32>
    %cst = arith.constant dense<0.000000e+00> : vector<64x96xf32>
    %11 = tpu.matmul %9, %10, %cst {dimension_numbers = #tpu.dot_dimension_numbers<[1], [0], [0], [1], [0, 0, 1, 1], [], []>} : vector<64x1xf32>, vector<1x96xf32>, vector<64x96xf32> -> vector<64x96xf32>
    %c0_12 = arith.constant 0 : index
    %c0_13 = arith.constant 0 : index
    %12 = vector.load %arg3[%c0_12, %c0_13] : memref<1x96xf32, #tpu.memory_space<vmem>>, vector<1x96xf32>
    %13 = vector.broadcast %12 : vector<1x96xf32> to vector<64x96xf32>
    %14 = arith.addf %11, %13 : vector<64x96xf32>
    %15 = vector.shape_cast %14 : vector<64x96xf32> to vector<8x8x96xf32>
    %c0_14 = arith.constant 0 : index
    %c0_15 = arith.constant 0 : index
    %c0_16 = arith.constant 0 : index
    %16 = vector.load %arg10[%c0_14, %c0_15, %c0_16] : memref<8x8x96xf32, #tpu.memory_space<vmem>>, vector<8x8x96xf32>
    tpu.vector_store %arg10[%c0_14, %c0_15, %c0_16], %15 {strides = array<i32>} : memref<8x8x96xf32, #tpu.memory_space<vmem>>, vector<8x8x96xf32>,
    %cst_17 = arith.constant 0.000000e+00 : f32
    %17 = vector.broadcast %cst_17 : f32 to vector<8x32xf32>
    %cst_18 = arith.constant 0.000000e+00 : f32
    %18 = vector.broadcast %cst_18 : f32 to vector<8x32xf32>
    %c0_i32 = arith.constant 0 : i32
    %19 = arith.index_cast %c0_i32 : i32 to index
    %c0_19 = arith.constant 0 : index
    %c0_20 = arith.constant 0 : index
    %20 = vector.load %arg10[%19, %c0_19, %c0_20] : memref<8x8x96xf32, #tpu.memory_space<vmem>>, vector<1x8x96xf32>
    %21 = vector.shape_cast %20 : vector<1x8x96xf32> to vector<8x96xf32>
    %cst_21 = arith.constant dense<0.000000e+00> : vector<8x96xf32>
    %22 = tpu.matmul %17, %0, %cst_21 {dimension_numbers = #tpu.dot_dimension_numbers<[1], [0], [0], [1], [0, 0, 1, 1], [], []>} : vector<8x32xf32>, vector<32x96xf32>, vector<8x96xf32> -> vector<8x96xf32>
    %23 = arith.addf %22, %4 : vector<8x96xf32>
    %24 = vector.extract_strided_slice %21 {offsets = [0, 0], sizes = [8, 32], strides = [1, 1]} : vector<8x96xf32> to vector<8x32xf32>
    %25 = vector.extract_strided_slice %23 {offsets = [0, 0], sizes = [8, 32], strides = [1, 1]} : vector<8x96xf32> to vector<8x32xf32>
    %26 = arith.addf %24, %25 : vector<8x32xf32>
    %27 = arith.negf %26 : vector<8x32xf32>
    %28 = math.exp %27 : vector<8x32xf32>
    %cst_22 = arith.constant 1.000000e+00 : f32
    %29 = vector.broadcast %cst_22 : f32 to vector<8x32xf32>
    %30 = arith.addf %29, %28 : vector<8x32xf32>
    %31 = arith.divf %29, %30 : vector<8x32xf32>
    %32 = vector.extract_strided_slice %21 {offsets = [0, 32], sizes = [8, 32], strides = [1, 1]} : vector<8x96xf32> to vector<8x32xf32>
    %33 = vector.extract_strided_slice %23 {offsets = [0, 32], sizes = [8, 32], strides = [1, 1]} : vector<8x96xf32> to vector<8x32xf32>
    %34 = arith.addf %32, %33 : vector<8x32xf32>
    %35 = arith.negf %34 : vector<8x32xf32>
    %36 = math.exp %35 : vector<8x32xf32>
    %cst_23 = arith.constant 1.000000e+00 : f32
    %37 = vector.broadcast %cst_23 : f32 to vector<8x32xf32>
    %38 = arith.addf %37, %36 : vector<8x32xf32>
    %39 = arith.divf %37, %38 : vector<8x32xf32>
    %40 = vector.extract_strided_slice %21 {offsets = [0, 64], sizes = [8, 32], strides = [1, 1]} : vector<8x96xf32> to vector<8x32xf32>
    %41 = vector.extract_strided_slice %23 {offsets = [0, 64], sizes = [8, 32], strides = [1, 1]} : vector<8x96xf32> to vector<8x32xf32>
    %42 = arith.mulf %31, %41 : vector<8x32xf32>
    %43 = arith.addf %40, %42 : vector<8x32xf32>
    %44 = math.tanh %43 : vector<8x32xf32>
    %cst_24 = arith.constant 1.000000e+00 : f32
    %45 = vector.broadcast %cst_24 : f32 to vector<8x32xf32>
    %46 = arith.subf %45, %39 : vector<8x32xf32>
    %47 = arith.mulf %46, %44 : vector<8x32xf32>
    %48 = arith.mulf %39, %17 : vector<8x32xf32>
    %49 = arith.addf %47, %48 : vector<8x32xf32>
    %50 = tpu.concatenate %49, %18 in 1 : vector<8x32xf32>, vector<8x32xf32> -> vector<8x64xf32>
    %cst_25 = arith.constant dense<0.000000e+00> : vector<8x192xf32>
    %51 = tpu.matmul %50, %1, %cst_25 {dimension_numbers = #tpu.dot_dimension_numbers<[1], [0], [0], [1], [0, 0, 1, 1], [], []>} : vector<8x64xf32>, vector<64x192xf32>, vector<8x192xf32> -> vector<8x192xf32>
    %52 = arith.addf %51, %7 : vector<8x192xf32>
    %53 = vector.extract_strided_slice %52 {offsets = [0, 0], sizes = [8, 96], strides = [1, 1]} : vector<8x192xf32> to vector<8x96xf32>
    %54 = vector.extract_strided_slice %52 {offsets = [0, 96], sizes = [8, 96], strides = [1, 1]} : vector<8x192xf32> to vector<8x96xf32>
    %55 = vector.extract_strided_slice %53 {offsets = [0, 0], sizes = [8, 32], strides = [1, 1]} : vector<8x96xf32> to vector<8x32xf32>
    %56 = vector.extract_strided_slice %54 {offsets = [0, 0], sizes = [8, 32], strides = [1, 1]} : vector<8x96xf32> to vector<8x32xf32>
    %57 = arith.addf %55, %56 : vector<8x32xf32>
    %58 = arith.negf %57 : vector<8x32xf32>
    %59 = math.exp %58 : vector<8x32xf32>
    %cst_26 = arith.constant 1.000000e+00 : f32
    %60 = vector.broadcast %cst_26 : f32 to vector<8x32xf32>
    %61 = arith.addf %60, %59 : vector<8x32xf32>
    %62 = arith.divf %60, %61 : vector<8x32xf32>
    %63 = vector.extract_strided_slice %53 {offsets = [0, 32], sizes = [8, 32], strides = [1, 1]} : vector<8x96xf32> to vector<8x32xf32>
    %64 = vector.extract_strided_slice %54 {offsets = [0, 32], sizes = [8, 32], strides = [1, 1]} : vector<8x96xf32> to vector<8x32xf32>
    %65 = arith.addf %63, %64 : vector<8x32xf32>
    %66 = arith.negf %65 : vector<8x32xf32>
    %67 = math.exp %66 : vector<8x32xf32>
    %cst_27 = arith.constant 1.000000e+00 : f32
    %68 = vector.broadcast %cst_27 : f32 to vector<8x32xf32>
    %69 = arith.addf %68, %67 : vector<8x32xf32>
    %70 = arith.divf %68, %69 : vector<8x32xf32>
    %71 = vector.extract_strided_slice %53 {offsets = [0, 64], sizes = [8, 32], strides = [1, 1]} : vector<8x96xf32> to vector<8x32xf32>
    %72 = vector.extract_strided_slice %54 {offsets = [0, 64], sizes = [8, 32], strides = [1, 1]} : vector<8x96xf32> to vector<8x32xf32>
    %73 = arith.mulf %62, %72 : vector<8x32xf32>
    %74 = arith.addf %71, %73 : vector<8x32xf32>
    %75 = math.tanh %74 : vector<8x32xf32>
    %cst_28 = arith.constant 1.000000e+00 : f32
    %76 = vector.broadcast %cst_28 : f32 to vector<8x32xf32>
    %77 = arith.subf %76, %70 : vector<8x32xf32>
    %78 = arith.mulf %77, %75 : vector<8x32xf32>
    %79 = arith.mulf %70, %18 : vector<8x32xf32>
    %80 = arith.addf %78, %79 : vector<8x32xf32>
    %c1_i32 = arith.constant 1 : i32
    %81 = arith.index_cast %c1_i32 : i32 to index
    %c0_29 = arith.constant 0 : index
    %c0_30 = arith.constant 0 : index
    %82 = vector.load %arg10[%81, %c0_29, %c0_30] : memref<8x8x96xf32, #tpu.memory_space<vmem>>, vector<1x8x96xf32>
    %83 = vector.shape_cast %82 : vector<1x8x96xf32> to vector<8x96xf32>
    %cst_31 = arith.constant dense<0.000000e+00> : vector<8x96xf32>
    %84 = tpu.matmul %49, %0, %cst_31 {dimension_numbers = #tpu.dot_dimension_numbers<[1], [0], [0], [1], [0, 0, 1, 1], [], []>} : vector<8x32xf32>, vector<32x96xf32>, vector<8x96xf32> -> vector<8x96xf32>
    %85 = arith.addf %84, %4 : vector<8x96xf32>
    %86 = vector.extract_strided_slice %83 {offsets = [0, 0], sizes = [8, 32], strides = [1, 1]} : vector<8x96xf32> to vector<8x32xf32>
    %87 = vector.extract_strided_slice %85 {offsets = [0, 0], sizes = [8, 32], strides = [1, 1]} : vector<8x96xf32> to vector<8x32xf32>
    %88 = arith.addf %86, %87 : vector<8x32xf32>
    %89 = arith.negf %88 : vector<8x32xf32>
    %90 = math.exp %89 : vector<8x32xf32>
    %cst_32 = arith.constant 1.000000e+00 : f32
    %91 = vector.broadcast %cst_32 : f32 to vector<8x32xf32>
    %92 = arith.addf %91, %90 : vector<8x32xf32>
    %93 = arith.divf %91, %92 : vector<8x32xf32>
    %94 = vector.extract_strided_slice %83 {offsets = [0, 32], sizes = [8, 32], strides = [1, 1]} : vector<8x96xf32> to vector<8x32xf32>
    %95 = vector.extract_strided_slice %85 {offsets = [0, 32], sizes = [8, 32], strides = [1, 1]} : vector<8x96xf32> to vector<8x32xf32>
    %96 = arith.addf %94, %95 : vector<8x32xf32>
    %97 = arith.negf %96 : vector<8x32xf32>
    %98 = math.exp %97 : vector<8x32xf32>
    %cst_33 = arith.constant 1.000000e+00 : f32
    %99 = vector.broadcast %cst_33 : f32 to vector<8x32xf32>
    %100 = arith.addf %99, %98 : vector<8x32xf32>
    %101 = arith.divf %99, %100 : vector<8x32xf32>
    %102 = vector.extract_strided_slice %83 {offsets = [0, 64], sizes = [8, 32], strides = [1, 1]} : vector<8x96xf32> to vector<8x32xf32>
    %103 = vector.extract_strided_slice %85 {offsets = [0, 64], sizes = [8, 32], strides = [1, 1]} : vector<8x96xf32> to vector<8x32xf32>
    %104 = arith.mulf %93, %103 : vector<8x32xf32>
    %105 = arith.addf %102, %104 : vector<8x32xf32>
    %106 = math.tanh %105 : vector<8x32xf32>
    %cst_34 = arith.constant 1.000000e+00 : f32
    %107 = vector.broadcast %cst_34 : f32 to vector<8x32xf32>
    %108 = arith.subf %107, %101 : vector<8x32xf32>
    %109 = arith.mulf %108, %106 : vector<8x32xf32>
    %110 = arith.mulf %101, %49 : vector<8x32xf32>
    %111 = arith.addf %109, %110 : vector<8x32xf32>
    %112 = tpu.concatenate %111, %80 in 1 : vector<8x32xf32>, vector<8x32xf32> -> vector<8x64xf32>
    %cst_35 = arith.constant dense<0.000000e+00> : vector<8x192xf32>
    %113 = tpu.matmul %112, %1, %cst_35 {dimension_numbers = #tpu.dot_dimension_numbers<[1], [0], [0], [1], [0, 0, 1, 1], [], []>} : vector<8x64xf32>, vector<64x192xf32>, vector<8x192xf32> -> vector<8x192xf32>
    %114 = arith.addf %113, %7 : vector<8x192xf32>
    %115 = vector.extract_strided_slice %114 {offsets = [0, 0], sizes = [8, 96], strides = [1, 1]} : vector<8x192xf32> to vector<8x96xf32>
    %116 = vector.extract_strided_slice %114 {offsets = [0, 96], sizes = [8, 96], strides = [1, 1]} : vector<8x192xf32> to vector<8x96xf32>
    %117 = vector.extract_strided_slice %115 {offsets = [0, 0], sizes = [8, 32], strides = [1, 1]} : vector<8x96xf32> to vector<8x32xf32>
    %118 = vector.extract_strided_slice %116 {offsets = [0, 0], sizes = [8, 32], strides = [1, 1]} : vector<8x96xf32> to vector<8x32xf32>
    %119 = arith.addf %117, %118 : vector<8x32xf32>
    %120 = arith.negf %119 : vector<8x32xf32>
    %121 = math.exp %120 : vector<8x32xf32>
    %cst_36 = arith.constant 1.000000e+00 : f32
    %122 = vector.broadcast %cst_36 : f32 to vector<8x32xf32>
    %123 = arith.addf %122, %121 : vector<8x32xf32>
    %124 = arith.divf %122, %123 : vector<8x32xf32>
    %125 = vector.extract_strided_slice %115 {offsets = [0, 32], sizes = [8, 32], strides = [1, 1]} : vector<8x96xf32> to vector<8x32xf32>
    %126 = vector.extract_strided_slice %116 {offsets = [0, 32], sizes = [8, 32], strides = [1, 1]} : vector<8x96xf32> to vector<8x32xf32>
    %127 = arith.addf %125, %126 : vector<8x32xf32>
    %128 = arith.negf %127 : vector<8x32xf32>
    %129 = math.exp %128 : vector<8x32xf32>
    %cst_37 = arith.constant 1.000000e+00 : f32
    %130 = vector.broadcast %cst_37 : f32 to vector<8x32xf32>
    %131 = arith.addf %130, %129 : vector<8x32xf32>
    %132 = arith.divf %130, %131 : vector<8x32xf32>
    %133 = vector.extract_strided_slice %115 {offsets = [0, 64], sizes = [8, 32], strides = [1, 1]} : vector<8x96xf32> to vector<8x32xf32>
    %134 = vector.extract_strided_slice %116 {offsets = [0, 64], sizes = [8, 32], strides = [1, 1]} : vector<8x96xf32> to vector<8x32xf32>
    %135 = arith.mulf %124, %134 : vector<8x32xf32>
    %136 = arith.addf %133, %135 : vector<8x32xf32>
    %137 = math.tanh %136 : vector<8x32xf32>
    %cst_38 = arith.constant 1.000000e+00 : f32
    %138 = vector.broadcast %cst_38 : f32 to vector<8x32xf32>
    %139 = arith.subf %138, %132 : vector<8x32xf32>
    %140 = arith.mulf %139, %137 : vector<8x32xf32>
    %141 = arith.mulf %132, %80 : vector<8x32xf32>
    %142 = arith.addf %140, %141 : vector<8x32xf32>
    %c2_i32 = arith.constant 2 : i32
    %143 = arith.index_cast %c2_i32 : i32 to index
    %c0_39 = arith.constant 0 : index
    %c0_40 = arith.constant 0 : index
    %144 = vector.load %arg10[%143, %c0_39, %c0_40] : memref<8x8x96xf32, #tpu.memory_space<vmem>>, vector<1x8x96xf32>
    %145 = vector.shape_cast %144 : vector<1x8x96xf32> to vector<8x96xf32>
    %cst_41 = arith.constant dense<0.000000e+00> : vector<8x96xf32>
    %146 = tpu.matmul %111, %0, %cst_41 {dimension_numbers = #tpu.dot_dimension_numbers<[1], [0], [0], [1], [0, 0, 1, 1], [], []>} : vector<8x32xf32>, vector<32x96xf32>, vector<8x96xf32> -> vector<8x96xf32>
    %147 = arith.addf %146, %4 : vector<8x96xf32>
    %148 = vector.extract_strided_slice %145 {offsets = [0, 0], sizes = [8, 32], strides = [1, 1]} : vector<8x96xf32> to vector<8x32xf32>
    %149 = vector.extract_strided_slice %147 {offsets = [0, 0], sizes = [8, 32], strides = [1, 1]} : vector<8x96xf32> to vector<8x32xf32>
    %150 = arith.addf %148, %149 : vector<8x32xf32>
    %151 = arith.negf %150 : vector<8x32xf32>
    %152 = math.exp %151 : vector<8x32xf32>
    %cst_42 = arith.constant 1.000000e+00 : f32
    %153 = vector.broadcast %cst_42 : f32 to vector<8x32xf32>
    %154 = arith.addf %153, %152 : vector<8x32xf32>
    %155 = arith.divf %153, %154 : vector<8x32xf32>
    %156 = vector.extract_strided_slice %145 {offsets = [0, 32], sizes = [8, 32], strides = [1, 1]} : vector<8x96xf32> to vector<8x32xf32>
    %157 = vector.extract_strided_slice %147 {offsets = [0, 32], sizes = [8, 32], strides = [1, 1]} : vector<8x96xf32> to vector<8x32xf32>
    %158 = arith.addf %156, %157 : vector<8x32xf32>
    %159 = arith.negf %158 : vector<8x32xf32>
    %160 = math.exp %159 : vector<8x32xf32>
    %cst_43 = arith.constant 1.000000e+00 : f32
    %161 = vector.broadcast %cst_43 : f32 to vector<8x32xf32>
    %162 = arith.addf %161, %160 : vector<8x32xf32>
    %163 = arith.divf %161, %162 : vector<8x32xf32>
    %164 = vector.extract_strided_slice %145 {offsets = [0, 64], sizes = [8, 32], strides = [1, 1]} : vector<8x96xf32> to vector<8x32xf32>
    %165 = vector.extract_strided_slice %147 {offsets = [0, 64], sizes = [8, 32], strides = [1, 1]} : vector<8x96xf32> to vector<8x32xf32>
    %166 = arith.mulf %155, %165 : vector<8x32xf32>
    %167 = arith.addf %164, %166 : vector<8x32xf32>
    %168 = math.tanh %167 : vector<8x32xf32>
    %cst_44 = arith.constant 1.000000e+00 : f32
    %169 = vector.broadcast %cst_44 : f32 to vector<8x32xf32>
    %170 = arith.subf %169, %163 : vector<8x32xf32>
    %171 = arith.mulf %170, %168 : vector<8x32xf32>
    %172 = arith.mulf %163, %111 : vector<8x32xf32>
    %173 = arith.addf %171, %172 : vector<8x32xf32>
    %174 = tpu.concatenate %173, %142 in 1 : vector<8x32xf32>, vector<8x32xf32> -> vector<8x64xf32>
    %cst_45 = arith.constant dense<0.000000e+00> : vector<8x192xf32>
    %175 = tpu.matmul %174, %1, %cst_45 {dimension_numbers = #tpu.dot_dimension_numbers<[1], [0], [0], [1], [0, 0, 1, 1], [], []>} : vector<8x64xf32>, vector<64x192xf32>, vector<8x192xf32> -> vector<8x192xf32>
    %176 = arith.addf %175, %7 : vector<8x192xf32>
    %177 = vector.extract_strided_slice %176 {offsets = [0, 0], sizes = [8, 96], strides = [1, 1]} : vector<8x192xf32> to vector<8x96xf32>
    %178 = vector.extract_strided_slice %176 {offsets = [0, 96], sizes = [8, 96], strides = [1, 1]} : vector<8x192xf32> to vector<8x96xf32>
    %179 = vector.extract_strided_slice %177 {offsets = [0, 0], sizes = [8, 32], strides = [1, 1]} : vector<8x96xf32> to vector<8x32xf32>
    %180 = vector.extract_strided_slice %178 {offsets = [0, 0], sizes = [8, 32], strides = [1, 1]} : vector<8x96xf32> to vector<8x32xf32>
    %181 = arith.addf %179, %180 : vector<8x32xf32>
    %182 = arith.negf %181 : vector<8x32xf32>
    %183 = math.exp %182 : vector<8x32xf32>
    %cst_46 = arith.constant 1.000000e+00 : f32
    %184 = vector.broadcast %cst_46 : f32 to vector<8x32xf32>
    %185 = arith.addf %184, %183 : vector<8x32xf32>
    %186 = arith.divf %184, %185 : vector<8x32xf32>
    %187 = vector.extract_strided_slice %177 {offsets = [0, 32], sizes = [8, 32], strides = [1, 1]} : vector<8x96xf32> to vector<8x32xf32>
    %188 = vector.extract_strided_slice %178 {offsets = [0, 32], sizes = [8, 32], strides = [1, 1]} : vector<8x96xf32> to vector<8x32xf32>
    %189 = arith.addf %187, %188 : vector<8x32xf32>
    %190 = arith.negf %189 : vector<8x32xf32>
    %191 = math.exp %190 : vector<8x32xf32>
    %cst_47 = arith.constant 1.000000e+00 : f32
    %192 = vector.broadcast %cst_47 : f32 to vector<8x32xf32>
    %193 = arith.addf %192, %191 : vector<8x32xf32>
    %194 = arith.divf %192, %193 : vector<8x32xf32>
    %195 = vector.extract_strided_slice %177 {offsets = [0, 64], sizes = [8, 32], strides = [1, 1]} : vector<8x96xf32> to vector<8x32xf32>
    %196 = vector.extract_strided_slice %178 {offsets = [0, 64], sizes = [8, 32], strides = [1, 1]} : vector<8x96xf32> to vector<8x32xf32>
    %197 = arith.mulf %186, %196 : vector<8x32xf32>
    %198 = arith.addf %195, %197 : vector<8x32xf32>
    %199 = math.tanh %198 : vector<8x32xf32>
    %cst_48 = arith.constant 1.000000e+00 : f32
    %200 = vector.broadcast %cst_48 : f32 to vector<8x32xf32>
    %201 = arith.subf %200, %194 : vector<8x32xf32>
    %202 = arith.mulf %201, %199 : vector<8x32xf32>
    %203 = arith.mulf %194, %142 : vector<8x32xf32>
    %204 = arith.addf %202, %203 : vector<8x32xf32>
    %c3_i32 = arith.constant 3 : i32
    %205 = arith.index_cast %c3_i32 : i32 to index
    %c0_49 = arith.constant 0 : index
    %c0_50 = arith.constant 0 : index
    %206 = vector.load %arg10[%205, %c0_49, %c0_50] : memref<8x8x96xf32, #tpu.memory_space<vmem>>, vector<1x8x96xf32>
    %207 = vector.shape_cast %206 : vector<1x8x96xf32> to vector<8x96xf32>
    %cst_51 = arith.constant dense<0.000000e+00> : vector<8x96xf32>
    %208 = tpu.matmul %173, %0, %cst_51 {dimension_numbers = #tpu.dot_dimension_numbers<[1], [0], [0], [1], [0, 0, 1, 1], [], []>} : vector<8x32xf32>, vector<32x96xf32>, vector<8x96xf32> -> vector<8x96xf32>
    %209 = arith.addf %208, %4 : vector<8x96xf32>
    %210 = vector.extract_strided_slice %207 {offsets = [0, 0], sizes = [8, 32], strides = [1, 1]} : vector<8x96xf32> to vector<8x32xf32>
    %211 = vector.extract_strided_slice %209 {offsets = [0, 0], sizes = [8, 32], strides = [1, 1]} : vector<8x96xf32> to vector<8x32xf32>
    %212 = arith.addf %210, %211 : vector<8x32xf32>
    %213 = arith.negf %212 : vector<8x32xf32>
    %214 = math.exp %213 : vector<8x32xf32>
    %cst_52 = arith.constant 1.000000e+00 : f32
    %215 = vector.broadcast %cst_52 : f32 to vector<8x32xf32>
    %216 = arith.addf %215, %214 : vector<8x32xf32>
    %217 = arith.divf %215, %216 : vector<8x32xf32>
    %218 = vector.extract_strided_slice %207 {offsets = [0, 32], sizes = [8, 32], strides = [1, 1]} : vector<8x96xf32> to vector<8x32xf32>
    %219 = vector.extract_strided_slice %209 {offsets = [0, 32], sizes = [8, 32], strides = [1, 1]} : vector<8x96xf32> to vector<8x32xf32>
    %220 = arith.addf %218, %219 : vector<8x32xf32>
    %221 = arith.negf %220 : vector<8x32xf32>
    %222 = math.exp %221 : vector<8x32xf32>
    %cst_53 = arith.constant 1.000000e+00 : f32
    %223 = vector.broadcast %cst_53 : f32 to vector<8x32xf32>
    %224 = arith.addf %223, %222 : vector<8x32xf32>
    %225 = arith.divf %223, %224 : vector<8x32xf32>
    %226 = vector.extract_strided_slice %207 {offsets = [0, 64], sizes = [8, 32], strides = [1, 1]} : vector<8x96xf32> to vector<8x32xf32>
    %227 = vector.extract_strided_slice %209 {offsets = [0, 64], sizes = [8, 32], strides = [1, 1]} : vector<8x96xf32> to vector<8x32xf32>
    %228 = arith.mulf %217, %227 : vector<8x32xf32>
    %229 = arith.addf %226, %228 : vector<8x32xf32>
    %230 = math.tanh %229 : vector<8x32xf32>
    %cst_54 = arith.constant 1.000000e+00 : f32
    %231 = vector.broadcast %cst_54 : f32 to vector<8x32xf32>
    %232 = arith.subf %231, %225 : vector<8x32xf32>
    %233 = arith.mulf %232, %230 : vector<8x32xf32>
    %234 = arith.mulf %225, %173 : vector<8x32xf32>
    %235 = arith.addf %233, %234 : vector<8x32xf32>
    %236 = tpu.concatenate %235, %204 in 1 : vector<8x32xf32>, vector<8x32xf32> -> vector<8x64xf32>
    %cst_55 = arith.constant dense<0.000000e+00> : vector<8x192xf32>
    %237 = tpu.matmul %236, %1, %cst_55 {dimension_numbers = #tpu.dot_dimension_numbers<[1], [0], [0], [1], [0, 0, 1, 1], [], []>} : vector<8x64xf32>, vector<64x192xf32>, vector<8x192xf32> -> vector<8x192xf32>
    %238 = arith.addf %237, %7 : vector<8x192xf32>
    %239 = vector.extract_strided_slice %238 {offsets = [0, 0], sizes = [8, 96], strides = [1, 1]} : vector<8x192xf32> to vector<8x96xf32>
    %240 = vector.extract_strided_slice %238 {offsets = [0, 96], sizes = [8, 96], strides = [1, 1]} : vector<8x192xf32> to vector<8x96xf32>
    %241 = vector.extract_strided_slice %239 {offsets = [0, 0], sizes = [8, 32], strides = [1, 1]} : vector<8x96xf32> to vector<8x32xf32>
    %242 = vector.extract_strided_slice %240 {offsets = [0, 0], sizes = [8, 32], strides = [1, 1]} : vector<8x96xf32> to vector<8x32xf32>
    %243 = arith.addf %241, %242 : vector<8x32xf32>
    %244 = arith.negf %243 : vector<8x32xf32>
    %245 = math.exp %244 : vector<8x32xf32>
    %cst_56 = arith.constant 1.000000e+00 : f32
    %246 = vector.broadcast %cst_56 : f32 to vector<8x32xf32>
    %247 = arith.addf %246, %245 : vector<8x32xf32>
    %248 = arith.divf %246, %247 : vector<8x32xf32>
    %249 = vector.extract_strided_slice %239 {offsets = [0, 32], sizes = [8, 32], strides = [1, 1]} : vector<8x96xf32> to vector<8x32xf32>
    %250 = vector.extract_strided_slice %240 {offsets = [0, 32], sizes = [8, 32], strides = [1, 1]} : vector<8x96xf32> to vector<8x32xf32>
    %251 = arith.addf %249, %250 : vector<8x32xf32>
    %252 = arith.negf %251 : vector<8x32xf32>
    %253 = math.exp %252 : vector<8x32xf32>
    %cst_57 = arith.constant 1.000000e+00 : f32
    %254 = vector.broadcast %cst_57 : f32 to vector<8x32xf32>
    %255 = arith.addf %254, %253 : vector<8x32xf32>
    %256 = arith.divf %254, %255 : vector<8x32xf32>
    %257 = vector.extract_strided_slice %239 {offsets = [0, 64], sizes = [8, 32], strides = [1, 1]} : vector<8x96xf32> to vector<8x32xf32>
    %258 = vector.extract_strided_slice %240 {offsets = [0, 64], sizes = [8, 32], strides = [1, 1]} : vector<8x96xf32> to vector<8x32xf32>
    %259 = arith.mulf %248, %258 : vector<8x32xf32>
    %260 = arith.addf %257, %259 : vector<8x32xf32>
    %261 = math.tanh %260 : vector<8x32xf32>
    %cst_58 = arith.constant 1.000000e+00 : f32
    %262 = vector.broadcast %cst_58 : f32 to vector<8x32xf32>
    %263 = arith.subf %262, %256 : vector<8x32xf32>
    %264 = arith.mulf %263, %261 : vector<8x32xf32>
    %265 = arith.mulf %256, %204 : vector<8x32xf32>
    %266 = arith.addf %264, %265 : vector<8x32xf32>
    %c4_i32 = arith.constant 4 : i32
    %267 = arith.index_cast %c4_i32 : i32 to index
    %c0_59 = arith.constant 0 : index
    %c0_60 = arith.constant 0 : index
    %268 = vector.load %arg10[%267, %c0_59, %c0_60] : memref<8x8x96xf32, #tpu.memory_space<vmem>>, vector<1x8x96xf32>
    %269 = vector.shape_cast %268 : vector<1x8x96xf32> to vector<8x96xf32>
    %cst_61 = arith.constant dense<0.000000e+00> : vector<8x96xf32>
    %270 = tpu.matmul %235, %0, %cst_61 {dimension_numbers = #tpu.dot_dimension_numbers<[1], [0], [0], [1], [0, 0, 1, 1], [], []>} : vector<8x32xf32>, vector<32x96xf32>, vector<8x96xf32> -> vector<8x96xf32>
    %271 = arith.addf %270, %4 : vector<8x96xf32>
    %272 = vector.extract_strided_slice %269 {offsets = [0, 0], sizes = [8, 32], strides = [1, 1]} : vector<8x96xf32> to vector<8x32xf32>
    %273 = vector.extract_strided_slice %271 {offsets = [0, 0], sizes = [8, 32], strides = [1, 1]} : vector<8x96xf32> to vector<8x32xf32>
    %274 = arith.addf %272, %273 : vector<8x32xf32>
    %275 = arith.negf %274 : vector<8x32xf32>
    %276 = math.exp %275 : vector<8x32xf32>
    %cst_62 = arith.constant 1.000000e+00 : f32
    %277 = vector.broadcast %cst_62 : f32 to vector<8x32xf32>
    %278 = arith.addf %277, %276 : vector<8x32xf32>
    %279 = arith.divf %277, %278 : vector<8x32xf32>
    %280 = vector.extract_strided_slice %269 {offsets = [0, 32], sizes = [8, 32], strides = [1, 1]} : vector<8x96xf32> to vector<8x32xf32>
    %281 = vector.extract_strided_slice %271 {offsets = [0, 32], sizes = [8, 32], strides = [1, 1]} : vector<8x96xf32> to vector<8x32xf32>
    %282 = arith.addf %280, %281 : vector<8x32xf32>
    %283 = arith.negf %282 : vector<8x32xf32>
    %284 = math.exp %283 : vector<8x32xf32>
    %cst_63 = arith.constant 1.000000e+00 : f32
    %285 = vector.broadcast %cst_63 : f32 to vector<8x32xf32>
    %286 = arith.addf %285, %284 : vector<8x32xf32>
    %287 = arith.divf %285, %286 : vector<8x32xf32>
    %288 = vector.extract_strided_slice %269 {offsets = [0, 64], sizes = [8, 32], strides = [1, 1]} : vector<8x96xf32> to vector<8x32xf32>
    %289 = vector.extract_strided_slice %271 {offsets = [0, 64], sizes = [8, 32], strides = [1, 1]} : vector<8x96xf32> to vector<8x32xf32>
    %290 = arith.mulf %279, %289 : vector<8x32xf32>
    %291 = arith.addf %288, %290 : vector<8x32xf32>
    %292 = math.tanh %291 : vector<8x32xf32>
    %cst_64 = arith.constant 1.000000e+00 : f32
    %293 = vector.broadcast %cst_64 : f32 to vector<8x32xf32>
    %294 = arith.subf %293, %287 : vector<8x32xf32>
    %295 = arith.mulf %294, %292 : vector<8x32xf32>
    %296 = arith.mulf %287, %235 : vector<8x32xf32>
    %297 = arith.addf %295, %296 : vector<8x32xf32>
    %298 = tpu.concatenate %297, %266 in 1 : vector<8x32xf32>, vector<8x32xf32> -> vector<8x64xf32>
    %cst_65 = arith.constant dense<0.000000e+00> : vector<8x192xf32>
    %299 = tpu.matmul %298, %1, %cst_65 {dimension_numbers = #tpu.dot_dimension_numbers<[1], [0], [0], [1], [0, 0, 1, 1], [], []>} : vector<8x64xf32>, vector<64x192xf32>, vector<8x192xf32> -> vector<8x192xf32>
    %300 = arith.addf %299, %7 : vector<8x192xf32>
    %301 = vector.extract_strided_slice %300 {offsets = [0, 0], sizes = [8, 96], strides = [1, 1]} : vector<8x192xf32> to vector<8x96xf32>
    %302 = vector.extract_strided_slice %300 {offsets = [0, 96], sizes = [8, 96], strides = [1, 1]} : vector<8x192xf32> to vector<8x96xf32>
    %303 = vector.extract_strided_slice %301 {offsets = [0, 0], sizes = [8, 32], strides = [1, 1]} : vector<8x96xf32> to vector<8x32xf32>
    %304 = vector.extract_strided_slice %302 {offsets = [0, 0], sizes = [8, 32], strides = [1, 1]} : vector<8x96xf32> to vector<8x32xf32>
    %305 = arith.addf %303, %304 : vector<8x32xf32>
    %306 = arith.negf %305 : vector<8x32xf32>
    %307 = math.exp %306 : vector<8x32xf32>
    %cst_66 = arith.constant 1.000000e+00 : f32
    %308 = vector.broadcast %cst_66 : f32 to vector<8x32xf32>
    %309 = arith.addf %308, %307 : vector<8x32xf32>
    %310 = arith.divf %308, %309 : vector<8x32xf32>
    %311 = vector.extract_strided_slice %301 {offsets = [0, 32], sizes = [8, 32], strides = [1, 1]} : vector<8x96xf32> to vector<8x32xf32>
    %312 = vector.extract_strided_slice %302 {offsets = [0, 32], sizes = [8, 32], strides = [1, 1]} : vector<8x96xf32> to vector<8x32xf32>
    %313 = arith.addf %311, %312 : vector<8x32xf32>
    %314 = arith.negf %313 : vector<8x32xf32>
    %315 = math.exp %314 : vector<8x32xf32>
    %cst_67 = arith.constant 1.000000e+00 : f32
    %316 = vector.broadcast %cst_67 : f32 to vector<8x32xf32>
    %317 = arith.addf %316, %315 : vector<8x32xf32>
    %318 = arith.divf %316, %317 : vector<8x32xf32>
    %319 = vector.extract_strided_slice %301 {offsets = [0, 64], sizes = [8, 32], strides = [1, 1]} : vector<8x96xf32> to vector<8x32xf32>
    %320 = vector.extract_strided_slice %302 {offsets = [0, 64], sizes = [8, 32], strides = [1, 1]} : vector<8x96xf32> to vector<8x32xf32>
    %321 = arith.mulf %310, %320 : vector<8x32xf32>
    %322 = arith.addf %319, %321 : vector<8x32xf32>
    %323 = math.tanh %322 : vector<8x32xf32>
    %cst_68 = arith.constant 1.000000e+00 : f32
    %324 = vector.broadcast %cst_68 : f32 to vector<8x32xf32>
    %325 = arith.subf %324, %318 : vector<8x32xf32>
    %326 = arith.mulf %325, %323 : vector<8x32xf32>
    %327 = arith.mulf %318, %266 : vector<8x32xf32>
    %328 = arith.addf %326, %327 : vector<8x32xf32>
    %c5_i32 = arith.constant 5 : i32
    %329 = arith.index_cast %c5_i32 : i32 to index
    %c0_69 = arith.constant 0 : index
    %c0_70 = arith.constant 0 : index
    %330 = vector.load %arg10[%329, %c0_69, %c0_70] : memref<8x8x96xf32, #tpu.memory_space<vmem>>, vector<1x8x96xf32>
    %331 = vector.shape_cast %330 : vector<1x8x96xf32> to vector<8x96xf32>
    %cst_71 = arith.constant dense<0.000000e+00> : vector<8x96xf32>
    %332 = tpu.matmul %297, %0, %cst_71 {dimension_numbers = #tpu.dot_dimension_numbers<[1], [0], [0], [1], [0, 0, 1, 1], [], []>} : vector<8x32xf32>, vector<32x96xf32>, vector<8x96xf32> -> vector<8x96xf32>
    %333 = arith.addf %332, %4 : vector<8x96xf32>
    %334 = vector.extract_strided_slice %331 {offsets = [0, 0], sizes = [8, 32], strides = [1, 1]} : vector<8x96xf32> to vector<8x32xf32>
    %335 = vector.extract_strided_slice %333 {offsets = [0, 0], sizes = [8, 32], strides = [1, 1]} : vector<8x96xf32> to vector<8x32xf32>
    %336 = arith.addf %334, %335 : vector<8x32xf32>
    %337 = arith.negf %336 : vector<8x32xf32>
    %338 = math.exp %337 : vector<8x32xf32>
    %cst_72 = arith.constant 1.000000e+00 : f32
    %339 = vector.broadcast %cst_72 : f32 to vector<8x32xf32>
    %340 = arith.addf %339, %338 : vector<8x32xf32>
    %341 = arith.divf %339, %340 : vector<8x32xf32>
    %342 = vector.extract_strided_slice %331 {offsets = [0, 32], sizes = [8, 32], strides = [1, 1]} : vector<8x96xf32> to vector<8x32xf32>
    %343 = vector.extract_strided_slice %333 {offsets = [0, 32], sizes = [8, 32], strides = [1, 1]} : vector<8x96xf32> to vector<8x32xf32>
    %344 = arith.addf %342, %343 : vector<8x32xf32>
    %345 = arith.negf %344 : vector<8x32xf32>
    %346 = math.exp %345 : vector<8x32xf32>
    %cst_73 = arith.constant 1.000000e+00 : f32
    %347 = vector.broadcast %cst_73 : f32 to vector<8x32xf32>
    %348 = arith.addf %347, %346 : vector<8x32xf32>
    %349 = arith.divf %347, %348 : vector<8x32xf32>
    %350 = vector.extract_strided_slice %331 {offsets = [0, 64], sizes = [8, 32], strides = [1, 1]} : vector<8x96xf32> to vector<8x32xf32>
    %351 = vector.extract_strided_slice %333 {offsets = [0, 64], sizes = [8, 32], strides = [1, 1]} : vector<8x96xf32> to vector<8x32xf32>
    %352 = arith.mulf %341, %351 : vector<8x32xf32>
    %353 = arith.addf %350, %352 : vector<8x32xf32>
    %354 = math.tanh %353 : vector<8x32xf32>
    %cst_74 = arith.constant 1.000000e+00 : f32
    %355 = vector.broadcast %cst_74 : f32 to vector<8x32xf32>
    %356 = arith.subf %355, %349 : vector<8x32xf32>
    %357 = arith.mulf %356, %354 : vector<8x32xf32>
    %358 = arith.mulf %349, %297 : vector<8x32xf32>
    %359 = arith.addf %357, %358 : vector<8x32xf32>
    %360 = tpu.concatenate %359, %328 in 1 : vector<8x32xf32>, vector<8x32xf32> -> vector<8x64xf32>
    %cst_75 = arith.constant dense<0.000000e+00> : vector<8x192xf32>
    %361 = tpu.matmul %360, %1, %cst_75 {dimension_numbers = #tpu.dot_dimension_numbers<[1], [0], [0], [1], [0, 0, 1, 1], [], []>} : vector<8x64xf32>, vector<64x192xf32>, vector<8x192xf32> -> vector<8x192xf32>
    %362 = arith.addf %361, %7 : vector<8x192xf32>
    %363 = vector.extract_strided_slice %362 {offsets = [0, 0], sizes = [8, 96], strides = [1, 1]} : vector<8x192xf32> to vector<8x96xf32>
    %364 = vector.extract_strided_slice %362 {offsets = [0, 96], sizes = [8, 96], strides = [1, 1]} : vector<8x192xf32> to vector<8x96xf32>
    %365 = vector.extract_strided_slice %363 {offsets = [0, 0], sizes = [8, 32], strides = [1, 1]} : vector<8x96xf32> to vector<8x32xf32>
    %366 = vector.extract_strided_slice %364 {offsets = [0, 0], sizes = [8, 32], strides = [1, 1]} : vector<8x96xf32> to vector<8x32xf32>
    %367 = arith.addf %365, %366 : vector<8x32xf32>
    %368 = arith.negf %367 : vector<8x32xf32>
    %369 = math.exp %368 : vector<8x32xf32>
    %cst_76 = arith.constant 1.000000e+00 : f32
    %370 = vector.broadcast %cst_76 : f32 to vector<8x32xf32>
    %371 = arith.addf %370, %369 : vector<8x32xf32>
    %372 = arith.divf %370, %371 : vector<8x32xf32>
    %373 = vector.extract_strided_slice %363 {offsets = [0, 32], sizes = [8, 32], strides = [1, 1]} : vector<8x96xf32> to vector<8x32xf32>
    %374 = vector.extract_strided_slice %364 {offsets = [0, 32], sizes = [8, 32], strides = [1, 1]} : vector<8x96xf32> to vector<8x32xf32>
    %375 = arith.addf %373, %374 : vector<8x32xf32>
    %376 = arith.negf %375 : vector<8x32xf32>
    %377 = math.exp %376 : vector<8x32xf32>
    %cst_77 = arith.constant 1.000000e+00 : f32
    %378 = vector.broadcast %cst_77 : f32 to vector<8x32xf32>
    %379 = arith.addf %378, %377 : vector<8x32xf32>
    %380 = arith.divf %378, %379 : vector<8x32xf32>
    %381 = vector.extract_strided_slice %363 {offsets = [0, 64], sizes = [8, 32], strides = [1, 1]} : vector<8x96xf32> to vector<8x32xf32>
    %382 = vector.extract_strided_slice %364 {offsets = [0, 64], sizes = [8, 32], strides = [1, 1]} : vector<8x96xf32> to vector<8x32xf32>
    %383 = arith.mulf %372, %382 : vector<8x32xf32>
    %384 = arith.addf %381, %383 : vector<8x32xf32>
    %385 = math.tanh %384 : vector<8x32xf32>
    %cst_78 = arith.constant 1.000000e+00 : f32
    %386 = vector.broadcast %cst_78 : f32 to vector<8x32xf32>
    %387 = arith.subf %386, %380 : vector<8x32xf32>
    %388 = arith.mulf %387, %385 : vector<8x32xf32>
    %389 = arith.mulf %380, %328 : vector<8x32xf32>
    %390 = arith.addf %388, %389 : vector<8x32xf32>
    %c6_i32 = arith.constant 6 : i32
    %391 = arith.index_cast %c6_i32 : i32 to index
    %c0_79 = arith.constant 0 : index
    %c0_80 = arith.constant 0 : index
    %392 = vector.load %arg10[%391, %c0_79, %c0_80] : memref<8x8x96xf32, #tpu.memory_space<vmem>>, vector<1x8x96xf32>
    %393 = vector.shape_cast %392 : vector<1x8x96xf32> to vector<8x96xf32>
    %cst_81 = arith.constant dense<0.000000e+00> : vector<8x96xf32>
    %394 = tpu.matmul %359, %0, %cst_81 {dimension_numbers = #tpu.dot_dimension_numbers<[1], [0], [0], [1], [0, 0, 1, 1], [], []>} : vector<8x32xf32>, vector<32x96xf32>, vector<8x96xf32> -> vector<8x96xf32>
    %395 = arith.addf %394, %4 : vector<8x96xf32>
    %396 = vector.extract_strided_slice %393 {offsets = [0, 0], sizes = [8, 32], strides = [1, 1]} : vector<8x96xf32> to vector<8x32xf32>
    %397 = vector.extract_strided_slice %395 {offsets = [0, 0], sizes = [8, 32], strides = [1, 1]} : vector<8x96xf32> to vector<8x32xf32>
    %398 = arith.addf %396, %397 : vector<8x32xf32>
    %399 = arith.negf %398 : vector<8x32xf32>
    %400 = math.exp %399 : vector<8x32xf32>
    %cst_82 = arith.constant 1.000000e+00 : f32
    %401 = vector.broadcast %cst_82 : f32 to vector<8x32xf32>
    %402 = arith.addf %401, %400 : vector<8x32xf32>
    %403 = arith.divf %401, %402 : vector<8x32xf32>
    %404 = vector.extract_strided_slice %393 {offsets = [0, 32], sizes = [8, 32], strides = [1, 1]} : vector<8x96xf32> to vector<8x32xf32>
    %405 = vector.extract_strided_slice %395 {offsets = [0, 32], sizes = [8, 32], strides = [1, 1]} : vector<8x96xf32> to vector<8x32xf32>
    %406 = arith.addf %404, %405 : vector<8x32xf32>
    %407 = arith.negf %406 : vector<8x32xf32>
    %408 = math.exp %407 : vector<8x32xf32>
    %cst_83 = arith.constant 1.000000e+00 : f32
    %409 = vector.broadcast %cst_83 : f32 to vector<8x32xf32>
    %410 = arith.addf %409, %408 : vector<8x32xf32>
    %411 = arith.divf %409, %410 : vector<8x32xf32>
    %412 = vector.extract_strided_slice %393 {offsets = [0, 64], sizes = [8, 32], strides = [1, 1]} : vector<8x96xf32> to vector<8x32xf32>
    %413 = vector.extract_strided_slice %395 {offsets = [0, 64], sizes = [8, 32], strides = [1, 1]} : vector<8x96xf32> to vector<8x32xf32>
    %414 = arith.mulf %403, %413 : vector<8x32xf32>
    %415 = arith.addf %412, %414 : vector<8x32xf32>
    %416 = math.tanh %415 : vector<8x32xf32>
    %cst_84 = arith.constant 1.000000e+00 : f32
    %417 = vector.broadcast %cst_84 : f32 to vector<8x32xf32>
    %418 = arith.subf %417, %411 : vector<8x32xf32>
    %419 = arith.mulf %418, %416 : vector<8x32xf32>
    %420 = arith.mulf %411, %359 : vector<8x32xf32>
    %421 = arith.addf %419, %420 : vector<8x32xf32>
    %422 = tpu.concatenate %421, %390 in 1 : vector<8x32xf32>, vector<8x32xf32> -> vector<8x64xf32>
    %cst_85 = arith.constant dense<0.000000e+00> : vector<8x192xf32>
    %423 = tpu.matmul %422, %1, %cst_85 {dimension_numbers = #tpu.dot_dimension_numbers<[1], [0], [0], [1], [0, 0, 1, 1], [], []>} : vector<8x64xf32>, vector<64x192xf32>, vector<8x192xf32> -> vector<8x192xf32>
    %424 = arith.addf %423, %7 : vector<8x192xf32>
    %425 = vector.extract_strided_slice %424 {offsets = [0, 0], sizes = [8, 96], strides = [1, 1]} : vector<8x192xf32> to vector<8x96xf32>
    %426 = vector.extract_strided_slice %424 {offsets = [0, 96], sizes = [8, 96], strides = [1, 1]} : vector<8x192xf32> to vector<8x96xf32>
    %427 = vector.extract_strided_slice %425 {offsets = [0, 0], sizes = [8, 32], strides = [1, 1]} : vector<8x96xf32> to vector<8x32xf32>
    %428 = vector.extract_strided_slice %426 {offsets = [0, 0], sizes = [8, 32], strides = [1, 1]} : vector<8x96xf32> to vector<8x32xf32>
    %429 = arith.addf %427, %428 : vector<8x32xf32>
    %430 = arith.negf %429 : vector<8x32xf32>
    %431 = math.exp %430 : vector<8x32xf32>
    %cst_86 = arith.constant 1.000000e+00 : f32
    %432 = vector.broadcast %cst_86 : f32 to vector<8x32xf32>
    %433 = arith.addf %432, %431 : vector<8x32xf32>
    %434 = arith.divf %432, %433 : vector<8x32xf32>
    %435 = vector.extract_strided_slice %425 {offsets = [0, 32], sizes = [8, 32], strides = [1, 1]} : vector<8x96xf32> to vector<8x32xf32>
    %436 = vector.extract_strided_slice %426 {offsets = [0, 32], sizes = [8, 32], strides = [1, 1]} : vector<8x96xf32> to vector<8x32xf32>
    %437 = arith.addf %435, %436 : vector<8x32xf32>
    %438 = arith.negf %437 : vector<8x32xf32>
    %439 = math.exp %438 : vector<8x32xf32>
    %cst_87 = arith.constant 1.000000e+00 : f32
    %440 = vector.broadcast %cst_87 : f32 to vector<8x32xf32>
    %441 = arith.addf %440, %439 : vector<8x32xf32>
    %442 = arith.divf %440, %441 : vector<8x32xf32>
    %443 = vector.extract_strided_slice %425 {offsets = [0, 64], sizes = [8, 32], strides = [1, 1]} : vector<8x96xf32> to vector<8x32xf32>
    %444 = vector.extract_strided_slice %426 {offsets = [0, 64], sizes = [8, 32], strides = [1, 1]} : vector<8x96xf32> to vector<8x32xf32>
    %445 = arith.mulf %434, %444 : vector<8x32xf32>
    %446 = arith.addf %443, %445 : vector<8x32xf32>
    %447 = math.tanh %446 : vector<8x32xf32>
    %cst_88 = arith.constant 1.000000e+00 : f32
    %448 = vector.broadcast %cst_88 : f32 to vector<8x32xf32>
    %449 = arith.subf %448, %442 : vector<8x32xf32>
    %450 = arith.mulf %449, %447 : vector<8x32xf32>
    %451 = arith.mulf %442, %390 : vector<8x32xf32>
    %452 = arith.addf %450, %451 : vector<8x32xf32>
    %c7_i32 = arith.constant 7 : i32
    %453 = arith.index_cast %c7_i32 : i32 to index
    %c0_89 = arith.constant 0 : index
    %c0_90 = arith.constant 0 : index
    %454 = vector.load %arg10[%453, %c0_89, %c0_90] : memref<8x8x96xf32, #tpu.memory_space<vmem>>, vector<1x8x96xf32>
    %455 = vector.shape_cast %454 : vector<1x8x96xf32> to vector<8x96xf32>
    %cst_91 = arith.constant dense<0.000000e+00> : vector<8x96xf32>
    %456 = tpu.matmul %421, %0, %cst_91 {dimension_numbers = #tpu.dot_dimension_numbers<[1], [0], [0], [1], [0, 0, 1, 1], [], []>} : vector<8x32xf32>, vector<32x96xf32>, vector<8x96xf32> -> vector<8x96xf32>
    %457 = arith.addf %456, %4 : vector<8x96xf32>
    %458 = vector.extract_strided_slice %455 {offsets = [0, 0], sizes = [8, 32], strides = [1, 1]} : vector<8x96xf32> to vector<8x32xf32>
    %459 = vector.extract_strided_slice %457 {offsets = [0, 0], sizes = [8, 32], strides = [1, 1]} : vector<8x96xf32> to vector<8x32xf32>
    %460 = arith.addf %458, %459 : vector<8x32xf32>
    %461 = arith.negf %460 : vector<8x32xf32>
    %462 = math.exp %461 : vector<8x32xf32>
    %cst_92 = arith.constant 1.000000e+00 : f32
    %463 = vector.broadcast %cst_92 : f32 to vector<8x32xf32>
    %464 = arith.addf %463, %462 : vector<8x32xf32>
    %465 = arith.divf %463, %464 : vector<8x32xf32>
    %466 = vector.extract_strided_slice %455 {offsets = [0, 32], sizes = [8, 32], strides = [1, 1]} : vector<8x96xf32> to vector<8x32xf32>
    %467 = vector.extract_strided_slice %457 {offsets = [0, 32], sizes = [8, 32], strides = [1, 1]} : vector<8x96xf32> to vector<8x32xf32>
    %468 = arith.addf %466, %467 : vector<8x32xf32>
    %469 = arith.negf %468 : vector<8x32xf32>
    %470 = math.exp %469 : vector<8x32xf32>
    %cst_93 = arith.constant 1.000000e+00 : f32
    %471 = vector.broadcast %cst_93 : f32 to vector<8x32xf32>
    %472 = arith.addf %471, %470 : vector<8x32xf32>
    %473 = arith.divf %471, %472 : vector<8x32xf32>
    %474 = vector.extract_strided_slice %455 {offsets = [0, 64], sizes = [8, 32], strides = [1, 1]} : vector<8x96xf32> to vector<8x32xf32>
    %475 = vector.extract_strided_slice %457 {offsets = [0, 64], sizes = [8, 32], strides = [1, 1]} : vector<8x96xf32> to vector<8x32xf32>
    %476 = arith.mulf %465, %475 : vector<8x32xf32>
    %477 = arith.addf %474, %476 : vector<8x32xf32>
    %478 = math.tanh %477 : vector<8x32xf32>
    %cst_94 = arith.constant 1.000000e+00 : f32
    %479 = vector.broadcast %cst_94 : f32 to vector<8x32xf32>
    %480 = arith.subf %479, %473 : vector<8x32xf32>
    %481 = arith.mulf %480, %478 : vector<8x32xf32>
    %482 = arith.mulf %473, %421 : vector<8x32xf32>
    %483 = arith.addf %481, %482 : vector<8x32xf32>
    %484 = tpu.concatenate %483, %452 in 1 : vector<8x32xf32>, vector<8x32xf32> -> vector<8x64xf32>
    %cst_95 = arith.constant dense<0.000000e+00> : vector<8x192xf32>
    %485 = tpu.matmul %484, %1, %cst_95 {dimension_numbers = #tpu.dot_dimension_numbers<[1], [0], [0], [1], [0, 0, 1, 1], [], []>} : vector<8x64xf32>, vector<64x192xf32>, vector<8x192xf32> -> vector<8x192xf32>
    %486 = arith.addf %485, %7 : vector<8x192xf32>
    %487 = vector.extract_strided_slice %486 {offsets = [0, 0], sizes = [8, 96], strides = [1, 1]} : vector<8x192xf32> to vector<8x96xf32>
    %488 = vector.extract_strided_slice %486 {offsets = [0, 96], sizes = [8, 96], strides = [1, 1]} : vector<8x192xf32> to vector<8x96xf32>
    %489 = vector.extract_strided_slice %487 {offsets = [0, 0], sizes = [8, 32], strides = [1, 1]} : vector<8x96xf32> to vector<8x32xf32>
    %490 = vector.extract_strided_slice %488 {offsets = [0, 0], sizes = [8, 32], strides = [1, 1]} : vector<8x96xf32> to vector<8x32xf32>
    %491 = arith.addf %489, %490 : vector<8x32xf32>
    %492 = arith.negf %491 : vector<8x32xf32>
    %493 = math.exp %492 : vector<8x32xf32>
    %cst_96 = arith.constant 1.000000e+00 : f32
    %494 = vector.broadcast %cst_96 : f32 to vector<8x32xf32>
    %495 = arith.addf %494, %493 : vector<8x32xf32>
    %496 = arith.divf %494, %495 : vector<8x32xf32>
    %497 = vector.extract_strided_slice %487 {offsets = [0, 32], sizes = [8, 32], strides = [1, 1]} : vector<8x96xf32> to vector<8x32xf32>
    %498 = vector.extract_strided_slice %488 {offsets = [0, 32], sizes = [8, 32], strides = [1, 1]} : vector<8x96xf32> to vector<8x32xf32>
    %499 = arith.addf %497, %498 : vector<8x32xf32>
    %500 = arith.negf %499 : vector<8x32xf32>
    %501 = math.exp %500 : vector<8x32xf32>
    %cst_97 = arith.constant 1.000000e+00 : f32
    %502 = vector.broadcast %cst_97 : f32 to vector<8x32xf32>
    %503 = arith.addf %502, %501 : vector<8x32xf32>
    %504 = arith.divf %502, %503 : vector<8x32xf32>
    %505 = vector.extract_strided_slice %487 {offsets = [0, 64], sizes = [8, 32], strides = [1, 1]} : vector<8x96xf32> to vector<8x32xf32>
    %506 = vector.extract_strided_slice %488 {offsets = [0, 64], sizes = [8, 32], strides = [1, 1]} : vector<8x96xf32> to vector<8x32xf32>
    %507 = arith.mulf %496, %506 : vector<8x32xf32>
    %508 = arith.addf %505, %507 : vector<8x32xf32>
    %509 = math.tanh %508 : vector<8x32xf32>
    %cst_98 = arith.constant 1.000000e+00 : f32
    %510 = vector.broadcast %cst_98 : f32 to vector<8x32xf32>
    %511 = arith.subf %510, %504 : vector<8x32xf32>
    %512 = arith.mulf %511, %509 : vector<8x32xf32>
    %513 = arith.mulf %504, %452 : vector<8x32xf32>
    %514 = arith.addf %512, %513 : vector<8x32xf32>
    %c8_i32 = arith.constant 8 : i32
    %c0_99 = arith.constant 0 : index
    %c0_100 = arith.constant 0 : index
    %515 = vector.load %arg7[%c0_99, %c0_100] : memref<1x32xf32, #tpu.memory_space<vmem>>, vector<1x32xf32>
    %516 = vector.shape_cast %515 : vector<1x32xf32> to vector<1x32xf32>
    %517 = vector.broadcast %516 : vector<1x32xf32> to vector<8x32xf32>
    %518 = arith.mulf %514, %517 : vector<8x32xf32>
    %cst_101 = arith.constant dense<0.000000e+00> : vector<8xf32>
    %519 = vector.multi_reduction <add>, %518, %cst_101 [1] : vector<8x32xf32> to vector<8xf32>
    %520 = vector.shape_cast %519 : vector<8xf32> to vector<8x1xf32>
    %c0_102 = arith.constant 0 : index
    %c0_103 = arith.constant 0 : index
    %521 = vector.load %arg8[%c0_102, %c0_103] : memref<1x1xf32, #tpu.memory_space<vmem>>, vector<1x1xf32>
    %522 = vector.broadcast %521 : vector<1x1xf32> to vector<8x1xf32>
    %523 = arith.addf %520, %522 : vector<8x1xf32>
    %c0_104 = arith.constant 0 : index
    %c0_105 = arith.constant 0 : index
    %524 = vector.load %arg9[%c0_104, %c0_105] : memref<8x1xf32, #tpu.memory_space<vmem>>, vector<8x1xf32>
    tpu.vector_store %arg9[%c0_104, %c0_105], %523 {strides = array<i32>} : memref<8x1xf32, #tpu.memory_space<vmem>>, vector<8x1xf32>,
    return
  }
}

</mosaic_0001>

<llo_original>
// kernel: tpu_custom_call.1
$region0: #{tpu_custom_call.1}
  #allocation0 [shape = 'u32[]', space=smem, size = 0x4, offset = 0x4, fixed_abs, tag = 'smem constant byte address 0x4 - core index']
  #allocation1 [shape = 'u32[144,128]{1,0:T(1,128)}', space=vmem, size = 0x12000, scoped, tag = 'internal scratch']
  #allocation2 [shape = 'f32[8,8,96]{2,1,0:T(8,128)}', space=vmem, size = 0x8000, scoped, tag = 'scratch operand']
  #allocation3 [shape = 'f32[1,1]{1,0:T(1,128)S(1)}', space=vmem, size = 0x200, scoped, tag = 'scoped memory for tpu_custom_call.1']
  %s0 = inlined_call_operand.vmem [shape: f32[8,8,1], index: 0, kind: input, shape index: {}]
  %s1 = inlined_call_operand.vmem [shape: f32[1,96], index: 1, kind: input, shape index: {}]
  %s2 = inlined_call_operand.vmem [shape: f32[32,96], index: 2, kind: input, shape index: {}]
  %s3 = inlined_call_operand.vmem [shape: f32[1,96], index: 3, kind: input, shape index: {}]
  %s4 = inlined_call_operand.vmem [shape: f32[1,96], index: 4, kind: input, shape index: {}]
  %s5 = inlined_call_operand.hbm [shape: f32[64,192], index: 5, kind: input, shape index: {}]
  %s6 = inlined_call_operand.vmem [shape: f32[1,192], index: 6, kind: input, shape index: {}]
  %s7 = inlined_call_operand.vmem [shape: f32[1,32], index: 7, kind: input, shape index: {}]
  %s8 = inlined_call_operand.<no memory space> [shape: f32[1,1], index: 8, kind: input, shape index: {}]
  %s9 = inlined_call_operand.vmem [shape: f32[8,1], index: 9, kind: output, shape index: {}]
  %s10 = sld [smem:[#allocation0]]
  $region50: #{tpu_custom_call.1} parent=0
    _
  %s12 = ssub.s32 1, %s10
  %s13 = scalar_select 0, %s12, %s10
  %v14 = vstv %s8
  %15 = vst [vmem:[#allocation3] sm:$0x1] %v14
  $region1: #{tpu_custom_call.1} parent=0
    #allocation4 [shape = 'u8[65536]{0}', space=vmem, size = 0x10000, scoped, tag = 'input window, operand 5, single buffered']
    #allocation5 [shape = 's32[1]{0}', space=sflag, size = 0x4, scoped, tag = 'scoped memory for tpu_custom_call.1']
    %16 = vsyncpa [#allocation5], 0
    // Predicated region
    $region2: #{tpu_custom_call.1} parent=1 // pred_check
      _
    $region3: #{tpu_custom_call.1} parent=1 // pred_check_branch
      %18 = sbr.rel (0) target = $region5
    $region4: #{tpu_custom_call.1} parent=1 // pred_region
      _
    $region5: #{tpu_custom_call.1} parent=1 // pred_fallthru
      _
    // Predicated region
    $region6: #{tpu_custom_call.1} parent=1 // pred_check
      _
    $region7: #{tpu_custom_call.1} parent=1 // pred_check_branch
      %20 = sbr.rel (0) target = $region9
    $region8: #{tpu_custom_call.1} parent=1 // pred_region
      _
    $region9: #{tpu_custom_call.1} parent=1 // pred_fallthru
      _
    // Predicated region
    $region10: #{tpu_custom_call.1} parent=1 // pred_check
      _
    $region11: #{tpu_custom_call.1} parent=1 // pred_check_branch
      %22 = sbr.rel (0) target = $region13
    $region12: #{tpu_custom_call.1} parent=1 // pred_region
      _
    $region13: #{tpu_custom_call.1} parent=1 // pred_fallthru
      _
    // Predicated region
    $region14: #{tpu_custom_call.1} parent=1 // pred_check
      _
    $region15: #{tpu_custom_call.1} parent=1 // pred_check_branch
      %24 = sbr.rel (0) target = $region17
    $region16: #{tpu_custom_call.1} parent=1 // pred_region
      _
    $region17: #{tpu_custom_call.1} parent=1 // pred_fallthru
      _
    // Predicated region
    $region18: #{tpu_custom_call.1} parent=1 // pred_check
      _
    $region19: #{tpu_custom_call.1} parent=1 // pred_check_branch
      %26 = sbr.rel (0) target = $region21
    $region20: #{tpu_custom_call.1} parent=1 // pred_region
      _
    $region21: #{tpu_custom_call.1} parent=1 // pred_fallthru
      _
    // Predicated region
    $region22: #{tpu_custom_call.1} parent=1 // pred_check
      _
    $region23: #{tpu_custom_call.1} parent=1 // pred_check_branch
      %28 = sbr.rel (0) target = $region25
    $region24: #{tpu_custom_call.1} parent=1 // pred_region
      %s30 = ssub.s32 2048, 2048
      %31 = vsyncadd [#allocation5], %s30
      %s32 = sshll.u32 [#allocation4], 4
      %s33 = int_to_ptr.vmem [resolvable:$true] %s32
      %38 = dma.hbm_to_vmem [thread:$0]  %s5, 2048, %s33, [#allocation5], 256, 256, 16
    $region25: #{tpu_custom_call.1} parent=1 // pred_fallthru
      _
    // Predicated region
    $region26: #{tpu_custom_call.1} parent=1 // pred_check
      _
    $region27: #{tpu_custom_call.1} parent=1 // pred_check_branch
      %40 = sbr.rel (0) target = $region29
    $region28: #{tpu_custom_call.1} parent=1 // pred_region
      _
    $region29: #{tpu_custom_call.1} parent=1 // pred_fallthru
      _
    // Predicated region
    $region30: #{tpu_custom_call.1} parent=1 // pred_check
      _
    $region31: #{tpu_custom_call.1} parent=1 // pred_check_branch
      %42 = sbr.rel (0) target = $region33
    $region32: #{tpu_custom_call.1} parent=1 // pred_region
      _
    $region33: #{tpu_custom_call.1} parent=1 // pred_fallthru
      _
    // Predicated region
    $region34: #{tpu_custom_call.1} parent=1 // pred_check
      _
    $region35: #{tpu_custom_call.1} parent=1 // pred_check_branch
      %44 = sbr.rel (0) target = $region37
    $region36: #{tpu_custom_call.1} parent=1 // pred_region
      _
    $region37: #{tpu_custom_call.1} parent=1 // pred_fallthru
      _
    // Predicated region
    $region38: #{tpu_custom_call.1} parent=1 // pred_check
      _
    $region39: #{tpu_custom_call.1} parent=1 // pred_check_branch
      %46 = sbr.rel (0) target = $region41
    $region40: #{tpu_custom_call.1} parent=1 // pred_region
      %47 = dma.done [#allocation5], 2048
    $region41: #{tpu_custom_call.1} parent=1 // pred_fallthru
      _
    %v48 = vld [vmem:[%s2] sm:$0xff]
    %v49 = vld [vmem:[%s2 + $0x8] sm:$0xff]
    %v50 = vld [vmem:[%s2 + $0x10] sm:$0xff]
    %v51 = vld [vmem:[%s2 + $0x18] sm:$0xff]
    %v52 = vld [vmem:[#allocation4] sm:$0xff]
    %v53 = vld [vmem:[#allocation4 + $0x8] sm:$0xff]
    %v54 = vld [vmem:[#allocation4 + $0x10] sm:$0xff]
    %v55 = vld [vmem:[#allocation4 + $0x18] sm:$0xff]
    %v56 = vld [vmem:[#allocation4 + $0x20] sm:$0xff]
    %v57 = vld [vmem:[#allocation4 + $0x28] sm:$0xff]
    %v58 = vld [vmem:[#allocation4 + $0x30] sm:$0xff]
    %v59 = vld [vmem:[#allocation4 + $0x38] sm:$0xff]
    %v60 = vld [vmem:[#allocation4 + $0x40] sm:$0xff]
    %v61 = vld [vmem:[#allocation4 + $0x48] sm:$0xff]
    %v62 = vld [vmem:[#allocation4 + $0x50] sm:$0xff]
    %v63 = vld [vmem:[#allocation4 + $0x58] sm:$0xff]
    %v64 = vld [vmem:[#allocation4 + $0x60] sm:$0xff]
    %v65 = vld [vmem:[#allocation4 + $0x68] sm:$0xff]
    %v66 = vld [vmem:[#allocation4 + $0x70] sm:$0xff]
    %v67 = vld [vmem:[#allocation4 + $0x78] sm:$0xff]
    %v68 = vld [vmem:[%s4] sm:$0x1]
    %v70 = vlaneseq
    %v71 = vshrl.u32 %v70, 7
    %v72 = vsub.s32 0, %v71
    %v73 = vrot.slane %v68, %v72
    %v75 = vld [vmem:[%s6] sm:$0x3]
    %v77 = vlaneseq
    %v78 = vshrl.u32 %v77, 7
    %v79 = vsub.s32 0, %v78
    %v80 = vrot.slane %v75, %v79
    %v81 = vlaneseq
    %v82 = vshrl.u32 %v81, 7
    %v83 = vsub.s32 1, %v82
    %v84 = vrot.slane %v75, %v83
    %v87 = vld [vmem:[%s0] sm:$0xff]
    %v88 = vld [vmem:[%s0 + $0x8] sm:$0xff]
    %v89 = vld [vmem:[%s0 + $0x10] sm:$0xff]
    %v90 = vld [vmem:[%s0 + $0x18] sm:$0xff]
    %v91 = vld [vmem:[%s0 + $0x20] sm:$0xff]
    %v92 = vld [vmem:[%s0 + $0x28] sm:$0xff]
    %v93 = vld [vmem:[%s0 + $0x30] sm:$0xff]
    %v94 = vld [vmem:[%s0 + $0x38] sm:$0xff]
    %v95 = vld [vmem:[%s1] sm:$0x1]
    %v96 = vld [vmem:[%s3] sm:$0x1]
    %v98 = vlaneseq
    %v99 = vshrl.u32 %v98, 7
    %v100 = vsub.s32 0, %v99
    %v101 = vrot.slane %v96, %v100
    %vm103 = vcmask 7168
    %v105 = vsel %vm103, %v87, 0
    %v108 = vsel %vm103, %v88, 0
    %v111 = vsel %vm103, %v89, 0
    %v114 = vsel %vm103, %v90, 0
    %v117 = vsel %vm103, %v91, 0
    %v120 = vsel %vm103, %v92, 0
    %v123 = vsel %vm103, %v93, 0
    %v126 = vsel %vm103, %v94, 0
    %vm128 = vcmask 1040384
    %v130 = vsel %vm128, %v95, 0
    %132 = vmatprep.subr.mxu0 0.0
    %133 = vmatpush1.msra.mxu0 0.0
    %134 = vmatprep.subr.mxu0 0.0
    %135 = vmatpush1.msra.mxu0 0.0
    %136 = vmatprep.subr.mxu0 0.0
    %137 = vmatpush1.msra.mxu0 0.0
    %138 = vmatprep.subr.mxu0 0.0
    %139 = vmatpush1.msra.mxu0 0.0
    %140 = vmatprep.subr.mxu0 0.0
    %141 = vmatpush1.msra.mxu0 0.0
    %142 = vmatprep.subr.mxu0 0.0
    %143 = vmatpush1.msra.mxu0 0.0
    %144 = vmatprep.subr.mxu0 0.0
    %145 = vmatpush1.msra.mxu0 0.0
    %146 = vmatprep.subr.mxu0 0.0
    %147 = vmatpush1.msra.mxu0 0.0
    %148 = vmatprep.subr.mxu0 0.0
    %149 = vmatpush1.msra.mxu0 0.0
    %150 = vmatprep.subr.mxu0 0.0
    %151 = vmatpush1.msra.mxu0 0.0
    %152 = vmatprep.subr.mxu0 0.0
    %153 = vmatpush1.msra.mxu0 0.0
    %154 = vmatprep.subr.mxu0 0.0
    %155 = vmatpush1.msra.mxu0 0.0
    %156 = vmatprep.subr.mxu0 0.0
    %157 = vmatpush1.msra.mxu0 0.0
    %158 = vmatprep.subr.mxu0 0.0
    %159 = vmatpush1.msra.mxu0 0.0
    %160 = vmatprep.subr.mxu0 0.0
    %161 = vmatpush1.msra.mxu0 0.0
    %162 = vmatprep.subr.mxu0 0.0
    %163 = vmatpush1.msra.mxu0 %v130
    %164 = vmatprep.subr.mxu0 0.0
    %165 = vmatpush2.msra.mxu0 0.0
    %166 = vmatprep.subr.mxu0 0.0
    %167 = vmatpush2.msra.mxu0 0.0
    %168 = vmatprep.subr.mxu0 0.0
    %169 = vmatpush2.msra.mxu0 0.0
    %170 = vmatprep.subr.mxu0 0.0
    %171 = vmatpush2.msra.mxu0 0.0
    %172 = vmatprep.subr.mxu0 0.0
    %173 = vmatpush2.msra.mxu0 0.0
    %174 = vmatprep.subr.mxu0 0.0
    %175 = vmatpush2.msra.mxu0 0.0
    %176 = vmatprep.subr.mxu0 0.0
    %177 = vmatpush2.msra.mxu0 0.0
    %178 = vmatprep.subr.mxu0 0.0
    %179 = vmatpush2.msra.mxu0 0.0
    %180 = vmatprep.subr.mxu0 0.0
    %181 = vmatpush2.msra.mxu0 0.0
    %182 = vmatprep.subr.mxu0 0.0
    %183 = vmatpush2.msra.mxu0 0.0
    %184 = vmatprep.subr.mxu0 0.0
    %185 = vmatpush2.msra.mxu0 0.0
    %186 = vmatprep.subr.mxu0 0.0
    %187 = vmatpush2.msra.mxu0 0.0
    %188 = vmatprep.subr.mxu0 0.0
    %189 = vmatpush2.msra.mxu0 0.0
    %190 = vmatprep.subr.mxu0 0.0
    %191 = vmatpush2.msra.mxu0 0.0
    %192 = vmatprep.subr.mxu0 0.0
    %193 = vmatpush2.msra.mxu0 0.0
    %194 = vmatprep.subr.mxu0 0.0
    %195 = vmatpush2.msra.mxu0 0.0
    %196 = vmatprep.mubr.f32.mxu0 0.0
    %197 = vmatmul.mubr.f32.gmra.mxu0 %v105
    %v198 = vpop.f32.mrf.mxu0
    %v199 = vadd.f32 %v101, %v198
    %v200 = vpop.f32.mrf.mxu0
    %201 = vmatprep.mubr.f32.mxu0 0.0
    %202 = vmatmul.mubr.f32.gmra.mxu0 %v108
    %v203 = vpop.f32.mrf.mxu0
    %v204 = vadd.f32 %v101, %v203
    %v205 = vpop.f32.mrf.mxu0
    %206 = vmatprep.mubr.f32.mxu0 0.0
    %207 = vmatmul.mubr.f32.gmra.mxu0 %v111
    %v208 = vpop.f32.mrf.mxu0
    %v209 = vadd.f32 %v101, %v208
    %v210 = vpop.f32.mrf.mxu0
    %211 = vmatprep.mubr.f32.mxu0 0.0
    %212 = vmatmul.mubr.f32.gmra.mxu0 %v114
    %v213 = vpop.f32.mrf.mxu0
    %v214 = vadd.f32 %v101, %v213
    %v215 = vpop.f32.mrf.mxu0
    %216 = vmatprep.mubr.f32.mxu0 0.0
    %217 = vmatmul.mubr.f32.gmra.mxu0 %v117
    %v218 = vpop.f32.mrf.mxu0
    %v219 = vadd.f32 %v101, %v218
    %v220 = vpop.f32.mrf.mxu0
    %221 = vmatprep.mubr.f32.mxu0 0.0
    %222 = vmatmul.mubr.f32.gmra.mxu0 %v120
    %v223 = vpop.f32.mrf.mxu0
    %v224 = vadd.f32 %v101, %v223
    %v225 = vpop.f32.mrf.mxu0
    %226 = vmatprep.mubr.f32.mxu0 0.0
    %227 = vmatmul.mubr.f32.gmra.mxu0 %v123
    %v228 = vpop.f32.mrf.mxu0
    %v229 = vadd.f32 %v101, %v228
    %v230 = vpop.f32.mrf.mxu0
    %231 = vmatprep.mubr.f32.mxu0 0.0
    %232 = vmatmul.mubr.f32.gmra.mxu0 %v126
    %v233 = vpop.f32.mrf.mxu0
    %v234 = vadd.f32 %v101, %v233
    %v235 = vpop.f32.mrf.mxu0
    %236 = vdwg.mxu0
    %vm237 = vcmask 785408
    %238 = vst.msk [vmem:[#allocation2] sm:$0xff] %vm237, %v199
    %239 = vst.msk [vmem:[#allocation2 + $0x8] sm:$0xff] %vm237, %v204
    %240 = vst.msk [vmem:[#allocation2 + $0x10] sm:$0xff] %vm237, %v209
    %241 = vst.msk [vmem:[#allocation2 + $0x18] sm:$0xff] %vm237, %v214
    %242 = vst.msk [vmem:[#allocation2 + $0x20] sm:$0xff] %vm237, %v219
    %243 = vst.msk [vmem:[#allocation2 + $0x28] sm:$0xff] %vm237, %v224
    %244 = vst.msk [vmem:[#allocation2 + $0x30] sm:$0xff] %vm237, %v229
    %245 = vst.msk [vmem:[#allocation2 + $0x38] sm:$0xff] %vm237, %v234
    %v246 = vld [vmem:[#allocation2] sm:$0xff]
    %vm247 = vcmask 261120
    %v249 = vsel %vm247, 0.0, 0
    %251 = vmatprep.subr.mxu0 0.0
    %252 = vmatpush1.msra.mxu0 0.0
    %253 = vmatprep.subr.mxu0 0.0
    %254 = vmatpush1.msra.mxu0 0.0
    %255 = vmatprep.subr.mxu0 0.0
    %256 = vmatpush1.msra.mxu0 0.0
    %257 = vmatprep.subr.mxu0 0.0
    %258 = vmatpush1.msra.mxu0 0.0
    %259 = vmatprep.subr.mxu0 0.0
    %260 = vmatpush1.msra.mxu0 0.0
    %261 = vmatprep.subr.mxu0 0.0
    %262 = vmatpush1.msra.mxu0 0.0
    %263 = vmatprep.subr.mxu0 0.0
    %264 = vmatpush1.msra.mxu0 0.0
    %265 = vmatprep.subr.mxu0 0.0
    %266 = vmatpush1.msra.mxu0 0.0
    %267 = vmatprep.subr.mxu0 0.0
    %268 = vmatpush1.msra.mxu0 0.0
    %269 = vmatprep.subr.mxu0 0.0
    %270 = vmatpush1.msra.mxu0 0.0
    %271 = vmatprep.subr.mxu0 0.0
    %272 = vmatpush1.msra.mxu0 0.0
    %273 = vmatprep.subr.mxu0 0.0
    %274 = vmatpush1.msra.mxu0 0.0
    %275 = vmatprep.subr.mxu0 0.0
    %276 = vmatpush1.msra.mxu0 %v51
    %277 = vmatprep.subr.mxu0 0.0
    %278 = vmatpush1.msra.mxu0 %v50
    %279 = vmatprep.subr.mxu0 0.0
    %280 = vmatpush1.msra.mxu0 %v49
    %281 = vmatprep.subr.mxu0 0.0
    %282 = vmatpush1.msra.mxu0 %v48
    %283 = vmatprep.subr.mxu0 0.0
    %284 = vmatpush2.msra.mxu0 0.0
    %285 = vmatprep.subr.mxu0 0.0
    %286 = vmatpush2.msra.mxu0 0.0
    %287 = vmatprep.subr.mxu0 0.0
    %288 = vmatpush2.msra.mxu0 0.0
    %289 = vmatprep.subr.mxu0 0.0
    %290 = vmatpush2.msra.mxu0 0.0
    %291 = vmatprep.subr.mxu0 0.0
    %292 = vmatpush2.msra.mxu0 0.0
    %293 = vmatprep.subr.mxu0 0.0
    %294 = vmatpush2.msra.mxu0 0.0
    %295 = vmatprep.subr.mxu0 0.0
    %296 = vmatpush2.msra.mxu0 0.0
    %297 = vmatprep.subr.mxu0 0.0
    %298 = vmatpush2.msra.mxu0 0.0
    %299 = vmatprep.subr.mxu0 0.0
    %300 = vmatpush2.msra.mxu0 0.0
    %301 = vmatprep.subr.mxu0 0.0
    %302 = vmatpush2.msra.mxu0 0.0
    %303 = vmatprep.subr.mxu0 0.0
    %304 = vmatpush2.msra.mxu0 0.0
    %305 = vmatprep.subr.mxu0 0.0
    %306 = vmatpush2.msra.mxu0 0.0
    %307 = vmatprep.subr.mxu0 0.0
    %308 = vmatpush2.msra.mxu0 0.0
    %309 = vmatprep.subr.mxu0 0.0
    %310 = vmatpush2.msra.mxu0 0.0
    %311 = vmatprep.subr.mxu0 0.0
    %312 = vmatpush2.msra.mxu0 0.0
    %313 = vmatprep.subr.mxu0 0.0
    %314 = vmatpush2.msra.mxu0 0.0
    %315 = vmatprep.mubr.f32.mxu0 0.0
    %316 = vmatmul.mubr.f32.gmra.mxu0 %v249
    %v317 = vpop.f32.mrf.mxu0
    %v318 = vadd.f32 %v73, %v317
    %v319 = vpop.f32.mrf.mxu0
    %320 = vdwg.mxu0
    %v321 = vadd.f32 %v246, %v318
    %v322 = vxor.u32 %v321, 2147483648
    %v323 = vmul.f32 %v322, 1.442695
    %v324 = vpow.pop %v323
    %v325 = vadd.f32 %v324, 1.0
    %v326 = vrcp.pop %v325
    %v327 = vmul.f32 1.0, %v326
    %329 = vrot.lane.b32.xlu0 %v318, 64
    %v330 = vpop.permute.xlu0 %329
    %v332 = vmul.f32 %v327, %v330
    %334 = vrot.lane.b32.xlu0 %v332, 64
    %v335 = vpop.permute.xlu0 %334
    %v337 = vadd.f32 %v246, %v335
    %v338 = vtanh.pop %v337
    %v339 = vsub.f32 1.0, %v327
    %341 = vrot.lane.b32.xlu0 %v338, 96
    %v342 = vpop.permute.xlu0 %341
    %v344 = vmul.f32 %v339, %v342
    %v345 = vmul.f32 %v327, 0.0
    %v346 = vadd.f32 %v344, %v345
    %348 = vrot.lane.b32.xlu0 %v346, 96
    %v349 = vpop.permute.xlu0 %348
    %v351 = vsel %vm247, %v349, 0.0
    %vm352 = vcmask 523264
    %v354 = vsel %vm352, %v351, 0
    %356 = vmatprep.subr.mxu0 0.0
    %357 = vmatpush1.msra.mxu0 0.0
    %358 = vmatprep.subr.mxu0 0.0
    %359 = vmatpush1.msra.mxu0 0.0
    %360 = vmatprep.subr.mxu0 0.0
    %361 = vmatpush1.msra.mxu0 0.0
    %362 = vmatprep.subr.mxu0 0.0
    %363 = vmatpush1.msra.mxu0 0.0
    %364 = vmatprep.subr.mxu0 0.0
    %365 = vmatpush1.msra.mxu0 0.0
    %366 = vmatprep.subr.mxu0 0.0
    %367 = vmatpush1.msra.mxu0 0.0
    %368 = vmatprep.subr.mxu0 0.0
    %369 = vmatpush1.msra.mxu0 0.0
    %370 = vmatprep.subr.mxu0 0.0
    %371 = vmatpush1.msra.mxu0 0.0
    %372 = vmatprep.subr.mxu0 %v67
    %373 = vmatpush1.msra.mxu0 %v66
    %374 = vmatprep.subr.mxu0 %v65
    %375 = vmatpush1.msra.mxu0 %v64
    %376 = vmatprep.subr.mxu0 %v63
    %377 = vmatpush1.msra.mxu0 %v62
    %378 = vmatprep.subr.mxu0 %v61
    %379 = vmatpush1.msra.mxu0 %v60
    %380 = vmatprep.subr.mxu0 %v59
    %381 = vmatpush1.msra.mxu0 %v58
    %382 = vmatprep.subr.mxu0 %v57
    %383 = vmatpush1.msra.mxu0 %v56
    %384 = vmatprep.subr.mxu0 %v55
    %385 = vmatpush1.msra.mxu0 %v54
    %386 = vmatprep.subr.mxu0 %v53
    %387 = vmatpush1.msra.mxu0 %v52
    %388 = vmatprep.subr.mxu0 0.0
    %389 = vmatpush2.msra.mxu0 0.0
    %390 = vmatprep.subr.mxu0 0.0
    %391 = vmatpush2.msra.mxu0 0.0
    %392 = vmatprep.subr.mxu0 0.0
    %393 = vmatpush2.msra.mxu0 0.0
    %394 = vmatprep.subr.mxu0 0.0
    %395 = vmatpush2.msra.mxu0 0.0
    %396 = vmatprep.subr.mxu0 0.0
    %397 = vmatpush2.msra.mxu0 0.0
    %398 = vmatprep.subr.mxu0 0.0
    %399 = vmatpush2.msra.mxu0 0.0
    %400 = vmatprep.subr.mxu0 0.0
    %401 = vmatpush2.msra.mxu0 0.0
    %402 = vmatprep.subr.mxu0 0.0
    %403 = vmatpush2.msra.mxu0 0.0
    %404 = vmatprep.subr.mxu0 0.0
    %405 = vmatpush2.msra.mxu0 0.0
    %406 = vmatprep.subr.mxu0 0.0
    %407 = vmatpush2.msra.mxu0 0.0
    %408 = vmatprep.subr.mxu0 0.0
    %409 = vmatpush2.msra.mxu0 0.0
    %410 = vmatprep.subr.mxu0 0.0
    %411 = vmatpush2.msra.mxu0 0.0
    %412 = vmatprep.subr.mxu0 0.0
    %413 = vmatpush2.msra.mxu0 0.0
    %414 = vmatprep.subr.mxu0 0.0
    %415 = vmatpush2.msra.mxu0 0.0
    %416 = vmatprep.subr.mxu0 0.0
    %417 = vmatpush2.msra.mxu0 0.0
    %418 = vmatprep.subr.mxu0 0.0
    %419 = vmatpush2.msra.mxu0 0.0
    %420 = vmatprep.mubr.f32.mxu0 0.0
    %421 = vmatmul.mubr.f32.gmra.mxu0 %v354
    %v422 = vpop.f32.mrf.mxu0
    %v423 = vadd.f32 %v80, %v422
    %v424 = vpop.f32.mrf.mxu0
    %v425 = vadd.f32 %v84, %v424
    %426 = vdwg.mxu0
    %428 = vrot.lane.b32.xlu0 %v423, 32
    %v429 = vpop.permute.xlu0 %428
    %v431 = vadd.f32 %v423, %v429
    %v432 = vxor.u32 %v431, 2147483648
    %v433 = vmul.f32 %v432, 1.442695
    %v434 = vpow.pop %v433
    %v435 = vadd.f32 %v434, 1.0
    %v436 = vrcp.pop %v435
    %v437 = vmul.f32 1.0, %v436
    %439 = vrot.lane.b32.xlu0 %v425, 32
    %v440 = vpop.permute.xlu0 %439
    %v442 = vadd.f32 %v423, %v440
    %v443 = vxor.u32 %v442, 2147483648
    %v444 = vmul.f32 %v443, 1.442695
    %v445 = vpow.pop %v444
    %v446 = vadd.f32 %v445, 1.0
    %v447 = vrcp.pop %v446
    %v448 = vmul.f32 1.0, %v447
    %449 = vrot.lane.b32.xlu0 %v425, 96
    %v450 = vpop.permute.xlu0 %449
    %v452 = vmul.f32 %v437, %v450
    %454 = vrot.lane.b32.xlu0 %v452, 64
    %v455 = vpop.permute.xlu0 %454
    %v457 = vadd.f32 %v423, %v455
    %v458 = vtanh.pop %v457
    %v459 = vsub.f32 1.0, %v448
    %461 = vrot.lane.b32.xlu0 %v458, 96
    %v462 = vpop.permute.xlu0 %461
    %v464 = vmul.f32 %v459, %v462
    %v465 = vmul.f32 %v448, 0.0
    %v466 = vadd.f32 %v464, %v465
    %s467 = scalar_lea.vmem [#allocation2], 8
    %v468 = vld [vmem:[%s467] sm:$0xff]
    %v469 = vsel %vm247, %v349, 0
    %471 = vmatprep.subr.mxu0 0.0
    %472 = vmatpush1.msra.mxu0 0.0
    %473 = vmatprep.subr.mxu0 0.0
    %474 = vmatpush1.msra.mxu0 0.0
    %475 = vmatprep.subr.mxu0 0.0
    %476 = vmatpush1.msra.mxu0 0.0
    %477 = vmatprep.subr.mxu0 0.0
    %478 = vmatpush1.msra.mxu0 0.0
    %479 = vmatprep.subr.mxu0 0.0
    %480 = vmatpush1.msra.mxu0 0.0
    %481 = vmatprep.subr.mxu0 0.0
    %482 = vmatpush1.msra.mxu0 0.0
    %483 = vmatprep.subr.mxu0 0.0
    %484 = vmatpush1.msra.mxu0 0.0
    %485 = vmatprep.subr.mxu0 0.0
    %486 = vmatpush1.msra.mxu0 0.0
    %487 = vmatprep.subr.mxu0 0.0
    %488 = vmatpush1.msra.mxu0 0.0
    %489 = vmatprep.subr.mxu0 0.0
    %490 = vmatpush1.msra.mxu0 0.0
    %491 = vmatprep.subr.mxu0 0.0
    %492 = vmatpush1.msra.mxu0 0.0
    %493 = vmatprep.subr.mxu0 0.0
    %494 = vmatpush1.msra.mxu0 0.0
    %495 = vmatprep.subr.mxu0 0.0
    %496 = vmatpush1.msra.mxu0 %v51
    %497 = vmatprep.subr.mxu0 0.0
    %498 = vmatpush1.msra.mxu0 %v50
    %499 = vmatprep.subr.mxu0 0.0
    %500 = vmatpush1.msra.mxu0 %v49
    %501 = vmatprep.subr.mxu0 0.0
    %502 = vmatpush1.msra.mxu0 %v48
    %503 = vmatprep.subr.mxu0 0.0
    %504 = vmatpush2.msra.mxu0 0.0
    %505 = vmatprep.subr.mxu0 0.0
    %506 = vmatpush2.msra.mxu0 0.0
    %507 = vmatprep.subr.mxu0 0.0
    %508 = vmatpush2.msra.mxu0 0.0
    %509 = vmatprep.subr.mxu0 0.0
    %510 = vmatpush2.msra.mxu0 0.0
    %511 = vmatprep.subr.mxu0 0.0
    %512 = vmatpush2.msra.mxu0 0.0
    %513 = vmatprep.subr.mxu0 0.0
    %514 = vmatpush2.msra.mxu0 0.0
    %515 = vmatprep.subr.mxu0 0.0
    %516 = vmatpush2.msra.mxu0 0.0
    %517 = vmatprep.subr.mxu0 0.0
    %518 = vmatpush2.msra.mxu0 0.0
    %519 = vmatprep.subr.mxu0 0.0
    %520 = vmatpush2.msra.mxu0 0.0
    %521 = vmatprep.subr.mxu0 0.0
    %522 = vmatpush2.msra.mxu0 0.0
    %523 = vmatprep.subr.mxu0 0.0
    %524 = vmatpush2.msra.mxu0 0.0
    %525 = vmatprep.subr.mxu0 0.0
    %526 = vmatpush2.msra.mxu0 0.0
    %527 = vmatprep.subr.mxu0 0.0
    %528 = vmatpush2.msra.mxu0 0.0
    %529 = vmatprep.subr.mxu0 0.0
    %530 = vmatpush2.msra.mxu0 0.0
    %531 = vmatprep.subr.mxu0 0.0
    %532 = vmatpush2.msra.mxu0 0.0
    %533 = vmatprep.subr.mxu0 0.0
    %534 = vmatpush2.msra.mxu0 0.0
    %535 = vmatprep.mubr.f32.mxu0 0.0
    %536 = vmatmul.mubr.f32.gmra.mxu0 %v469
    %v537 = vpop.f32.mrf.mxu0
    %v538 = vadd.f32 %v73, %v537
    %v539 = vpop.f32.mrf.mxu0
    %540 = vdwg.mxu0
    %v541 = vadd.f32 %v468, %v538
    %v542 = vxor.u32 %v541, 2147483648
    %v543 = vmul.f32 %v542, 1.442695
    %v544 = vpow.pop %v543
    %v545 = vadd.f32 %v544, 1.0
    %v546 = vrcp.pop %v545
    %v547 = vmul.f32 1.0, %v546
    %549 = vrot.lane.b32.xlu0 %v538, 64
    %v550 = vpop.permute.xlu0 %549
    %v552 = vmul.f32 %v547, %v550
    %554 = vrot.lane.b32.xlu0 %v552, 64
    %v555 = vpop.permute.xlu0 %554
    %v557 = vadd.f32 %v468, %v555
    %v558 = vtanh.pop %v557
    %v559 = vsub.f32 1.0, %v547
    %561 = vrot.lane.b32.xlu0 %v558, 96
    %v562 = vpop.permute.xlu0 %561
    %v564 = vmul.f32 %v559, %v562
    %v565 = vmul.f32 %v547, %v346
    %v566 = vadd.f32 %v564, %v565
    %568 = vrot.lane.b32.xlu0 %v566, 96
    %v569 = vpop.permute.xlu0 %568
    %v571 = vsel %vm247, %v569, %v466
    %v573 = vsel %vm352, %v571, 0
    %575 = vmatprep.subr.mxu0 0.0
    %576 = vmatpush1.msra.mxu0 0.0
    %577 = vmatprep.subr.mxu0 0.0
    %578 = vmatpush1.msra.mxu0 0.0
    %579 = vmatprep.subr.mxu0 0.0
    %580 = vmatpush1.msra.mxu0 0.0
    %581 = vmatprep.subr.mxu0 0.0
    %582 = vmatpush1.msra.mxu0 0.0
    %583 = vmatprep.subr.mxu0 0.0
    %584 = vmatpush1.msra.mxu0 0.0
    %585 = vmatprep.subr.mxu0 0.0
    %586 = vmatpush1.msra.mxu0 0.0
    %587 = vmatprep.subr.mxu0 0.0
    %588 = vmatpush1.msra.mxu0 0.0
    %589 = vmatprep.subr.mxu0 0.0
    %590 = vmatpush1.msra.mxu0 0.0
    %591 = vmatprep.subr.mxu0 %v67
    %592 = vmatpush1.msra.mxu0 %v66
    %593 = vmatprep.subr.mxu0 %v65
    %594 = vmatpush1.msra.mxu0 %v64
    %595 = vmatprep.subr.mxu0 %v63
    %596 = vmatpush1.msra.mxu0 %v62
    %597 = vmatprep.subr.mxu0 %v61
    %598 = vmatpush1.msra.mxu0 %v60
    %599 = vmatprep.subr.mxu0 %v59
    %600 = vmatpush1.msra.mxu0 %v58
    %601 = vmatprep.subr.mxu0 %v57
    %602 = vmatpush1.msra.mxu0 %v56
    %603 = vmatprep.subr.mxu0 %v55
    %604 = vmatpush1.msra.mxu0 %v54
    %605 = vmatprep.subr.mxu0 %v53
    %606 = vmatpush1.msra.mxu0 %v52
    %607 = vmatprep.subr.mxu0 0.0
    %608 = vmatpush2.msra.mxu0 0.0
    %609 = vmatprep.subr.mxu0 0.0
    %610 = vmatpush2.msra.mxu0 0.0
    %611 = vmatprep.subr.mxu0 0.0
    %612 = vmatpush2.msra.mxu0 0.0
    %613 = vmatprep.subr.mxu0 0.0
    %614 = vmatpush2.msra.mxu0 0.0
    %615 = vmatprep.subr.mxu0 0.0
    %616 = vmatpush2.msra.mxu0 0.0
    %617 = vmatprep.subr.mxu0 0.0
    %618 = vmatpush2.msra.mxu0 0.0
    %619 = vmatprep.subr.mxu0 0.0
    %620 = vmatpush2.msra.mxu0 0.0
    %621 = vmatprep.subr.mxu0 0.0
    %622 = vmatpush2.msra.mxu0 0.0
    %623 = vmatprep.subr.mxu0 0.0
    %624 = vmatpush2.msra.mxu0 0.0
    %625 = vmatprep.subr.mxu0 0.0
    %626 = vmatpush2.msra.mxu0 0.0
    %627 = vmatprep.subr.mxu0 0.0
    %628 = vmatpush2.msra.mxu0 0.0
    %629 = vmatprep.subr.mxu0 0.0
    %630 = vmatpush2.msra.mxu0 0.0
    %631 = vmatprep.subr.mxu0 0.0
    %632 = vmatpush2.msra.mxu0 0.0
    %633 = vmatprep.subr.mxu0 0.0
    %634 = vmatpush2.msra.mxu0 0.0
    %635 = vmatprep.subr.mxu0 0.0
    %636 = vmatpush2.msra.mxu0 0.0
    %637 = vmatprep.subr.mxu0 0.0
    %638 = vmatpush2.msra.mxu0 0.0
    %639 = vmatprep.mubr.f32.mxu0 0.0
    %640 = vmatmul.mubr.f32.gmra.mxu0 %v573
    %v641 = vpop.f32.mrf.mxu0
    %v642 = vadd.f32 %v80, %v641
    %v643 = vpop.f32.mrf.mxu0
    %v644 = vadd.f32 %v84, %v643
    %645 = vdwg.mxu0
    %647 = vrot.lane.b32.xlu0 %v642, 32
    %v648 = vpop.permute.xlu0 %647
    %v650 = vadd.f32 %v642, %v648
    %v651 = vxor.u32 %v650, 2147483648
    %v652 = vmul.f32 %v651, 1.442695
    %v653 = vpow.pop %v652
    %v654 = vadd.f32 %v653, 1.0
    %v655 = vrcp.pop %v654
    %v656 = vmul.f32 1.0, %v655
    %658 = vrot.lane.b32.xlu0 %v644, 32
    %v659 = vpop.permute.xlu0 %658
    %v661 = vadd.f32 %v642, %v659
    %v662 = vxor.u32 %v661, 2147483648
    %v663 = vmul.f32 %v662, 1.442695
    %v664 = vpow.pop %v663
    %v665 = vadd.f32 %v664, 1.0
    %v666 = vrcp.pop %v665
    %v667 = vmul.f32 1.0, %v666
    %668 = vrot.lane.b32.xlu0 %v644, 96
    %v669 = vpop.permute.xlu0 %668
    %v671 = vmul.f32 %v656, %v669
    %673 = vrot.lane.b32.xlu0 %v671, 64
    %v674 = vpop.permute.xlu0 %673
    %v676 = vadd.f32 %v642, %v674
    %v677 = vtanh.pop %v676
    %v678 = vsub.f32 1.0, %v667
    %680 = vrot.lane.b32.xlu0 %v677, 96
    %v681 = vpop.permute.xlu0 %680
    %v683 = vmul.f32 %v678, %v681
    %v684 = vmul.f32 %v667, %v466
    %v685 = vadd.f32 %v683, %v684
    %s686 = scalar_lea.vmem [#allocation2], 16
    %v687 = vld [vmem:[%s686] sm:$0xff]
    %v688 = vsel %vm247, %v569, 0
    %690 = vmatprep.subr.mxu0 0.0
    %691 = vmatpush1.msra.mxu0 0.0
    %692 = vmatprep.subr.mxu0 0.0
    %693 = vmatpush1.msra.mxu0 0.0
    %694 = vmatprep.subr.mxu0 0.0
    %695 = vmatpush1.msra.mxu0 0.0
    %696 = vmatprep.subr.mxu0 0.0
    %697 = vmatpush1.msra.mxu0 0.0
    %698 = vmatprep.subr.mxu0 0.0
    %699 = vmatpush1.msra.mxu0 0.0
    %700 = vmatprep.subr.mxu0 0.0
    %701 = vmatpush1.msra.mxu0 0.0
    %702 = vmatprep.subr.mxu0 0.0
    %703 = vmatpush1.msra.mxu0 0.0
    %704 = vmatprep.subr.mxu0 0.0
    %705 = vmatpush1.msra.mxu0 0.0
    %706 = vmatprep.subr.mxu0 0.0
    %707 = vmatpush1.msra.mxu0 0.0
    %708 = vmatprep.subr.mxu0 0.0
    %709 = vmatpush1.msra.mxu0 0.0
    %710 = vmatprep.subr.mxu0 0.0
    %711 = vmatpush1.msra.mxu0 0.0
    %712 = vmatprep.subr.mxu0 0.0
    %713 = vmatpush1.msra.mxu0 0.0
    %714 = vmatprep.subr.mxu0 0.0
    %715 = vmatpush1.msra.mxu0 %v51
    %716 = vmatprep.subr.mxu0 0.0
    %717 = vmatpush1.msra.mxu0 %v50
    %718 = vmatprep.subr.mxu0 0.0
    %719 = vmatpush1.msra.mxu0 %v49
    %720 = vmatprep.subr.mxu0 0.0
    %721 = vmatpush1.msra.mxu0 %v48
    %722 = vmatprep.subr.mxu0 0.0
    %723 = vmatpush2.msra.mxu0 0.0
    %724 = vmatprep.subr.mxu0 0.0
    %725 = vmatpush2.msra.mxu0 0.0
    %726 = vmatprep.subr.mxu0 0.0
    %727 = vmatpush2.msra.mxu0 0.0
    %728 = vmatprep.subr.mxu0 0.0
    %729 = vmatpush2.msra.mxu0 0.0
    %730 = vmatprep.subr.mxu0 0.0
    %731 = vmatpush2.msra.mxu0 0.0
    %732 = vmatprep.subr.mxu0 0.0
    %733 = vmatpush2.msra.mxu0 0.0
    %734 = vmatprep.subr.mxu0 0.0
    %735 = vmatpush2.msra.mxu0 0.0
    %736 = vmatprep.subr.mxu0 0.0
    %737 = vmatpush2.msra.mxu0 0.0
    %738 = vmatprep.subr.mxu0 0.0
    %739 = vmatpush2.msra.mxu0 0.0
    %740 = vmatprep.subr.mxu0 0.0
    %741 = vmatpush2.msra.mxu0 0.0
    %742 = vmatprep.subr.mxu0 0.0
    %743 = vmatpush2.msra.mxu0 0.0
    %744 = vmatprep.subr.mxu0 0.0
    %745 = vmatpush2.msra.mxu0 0.0
    %746 = vmatprep.subr.mxu0 0.0
    %747 = vmatpush2.msra.mxu0 0.0
    %748 = vmatprep.subr.mxu0 0.0
    %749 = vmatpush2.msra.mxu0 0.0
    %750 = vmatprep.subr.mxu0 0.0
    %751 = vmatpush2.msra.mxu0 0.0
    %752 = vmatprep.subr.mxu0 0.0
    %753 = vmatpush2.msra.mxu0 0.0
    %754 = vmatprep.mubr.f32.mxu0 0.0
    %755 = vmatmul.mubr.f32.gmra.mxu0 %v688
    %v756 = vpop.f32.mrf.mxu0
    %v757 = vadd.f32 %v73, %v756
    %v758 = vpop.f32.mrf.mxu0
    %759 = vdwg.mxu0
    %v760 = vadd.f32 %v687, %v757
    %v761 = vxor.u32 %v760, 2147483648
    %v762 = vmul.f32 %v761, 1.442695
    %v763 = vpow.pop %v762
    %v764 = vadd.f32 %v763, 1.0
    %v765 = vrcp.pop %v764
    %v766 = vmul.f32 1.0, %v765
    %768 = vrot.lane.b32.xlu0 %v757, 64
    %v769 = vpop.permute.xlu0 %768
    %v771 = vmul.f32 %v766, %v769
    %773 = vrot.lane.b32.xlu0 %v771, 64
    %v774 = vpop.permute.xlu0 %773
    %v776 = vadd.f32 %v687, %v774
    %v777 = vtanh.pop %v776
    %v778 = vsub.f32 1.0, %v766
    %780 = vrot.lane.b32.xlu0 %v777, 96
    %v781 = vpop.permute.xlu0 %780
    %v783 = vmul.f32 %v778, %v781
    %v784 = vmul.f32 %v766, %v566
    %v785 = vadd.f32 %v783, %v784
    %787 = vrot.lane.b32.xlu0 %v785, 96
    %v788 = vpop.permute.xlu0 %787
    %v790 = vsel %vm247, %v788, %v685
    %v792 = vsel %vm352, %v790, 0
    %794 = vmatprep.subr.mxu0 0.0
    %795 = vmatpush1.msra.mxu0 0.0
    %796 = vmatprep.subr.mxu0 0.0
    %797 = vmatpush1.msra.mxu0 0.0
    %798 = vmatprep.subr.mxu0 0.0
    %799 = vmatpush1.msra.mxu0 0.0
    %800 = vmatprep.subr.mxu0 0.0
    %801 = vmatpush1.msra.mxu0 0.0
    %802 = vmatprep.subr.mxu0 0.0
    %803 = vmatpush1.msra.mxu0 0.0
    %804 = vmatprep.subr.mxu0 0.0
    %805 = vmatpush1.msra.mxu0 0.0
    %806 = vmatprep.subr.mxu0 0.0
    %807 = vmatpush1.msra.mxu0 0.0
    %808 = vmatprep.subr.mxu0 0.0
    %809 = vmatpush1.msra.mxu0 0.0
    %810 = vmatprep.subr.mxu0 %v67
    %811 = vmatpush1.msra.mxu0 %v66
    %812 = vmatprep.subr.mxu0 %v65
    %813 = vmatpush1.msra.mxu0 %v64
    %814 = vmatprep.subr.mxu0 %v63
    %815 = vmatpush1.msra.mxu0 %v62
    %816 = vmatprep.subr.mxu0 %v61
    %817 = vmatpush1.msra.mxu0 %v60
    %818 = vmatprep.subr.mxu0 %v59
    %819 = vmatpush1.msra.mxu0 %v58
    %820 = vmatprep.subr.mxu0 %v57
    %821 = vmatpush1.msra.mxu0 %v56
    %822 = vmatprep.subr.mxu0 %v55
    %823 = vmatpush1.msra.mxu0 %v54
    %824 = vmatprep.subr.mxu0 %v53
    %825 = vmatpush1.msra.mxu0 %v52
    %826 = vmatprep.subr.mxu0 0.0
    %827 = vmatpush2.msra.mxu0 0.0
    %828 = vmatprep.subr.mxu0 0.0
    %829 = vmatpush2.msra.mxu0 0.0
    %830 = vmatprep.subr.mxu0 0.0
    %831 = vmatpush2.msra.mxu0 0.0
    %832 = vmatprep.subr.mxu0 0.0
    %833 = vmatpush2.msra.mxu0 0.0
    %834 = vmatprep.subr.mxu0 0.0
    %835 = vmatpush2.msra.mxu0 0.0
    %836 = vmatprep.subr.mxu0 0.0
    %837 = vmatpush2.msra.mxu0 0.0
    %838 = vmatprep.subr.mxu0 0.0
    %839 = vmatpush2.msra.mxu0 0.0
    %840 = vmatprep.subr.mxu0 0.0
    %841 = vmatpush2.msra.mxu0 0.0
    %842 = vmatprep.subr.mxu0 0.0
    %843 = vmatpush2.msra.mxu0 0.0
    %844 = vmatprep.subr.mxu0 0.0
    %845 = vmatpush2.msra.mxu0 0.0
    %846 = vmatprep.subr.mxu0 0.0
    %847 = vmatpush2.msra.mxu0 0.0
    %848 = vmatprep.subr.mxu0 0.0
    %849 = vmatpush2.msra.mxu0 0.0
    %850 = vmatprep.subr.mxu0 0.0
    %851 = vmatpush2.msra.mxu0 0.0
    %852 = vmatprep.subr.mxu0 0.0
    %853 = vmatpush2.msra.mxu0 0.0
    %854 = vmatprep.subr.mxu0 0.0
    %855 = vmatpush2.msra.mxu0 0.0
    %856 = vmatprep.subr.mxu0 0.0
    %857 = vmatpush2.msra.mxu0 0.0
    %858 = vmatprep.mubr.f32.mxu0 0.0
    %859 = vmatmul.mubr.f32.gmra.mxu0 %v792
    %v860 = vpop.f32.mrf.mxu0
    %v861 = vadd.f32 %v80, %v860
    %v862 = vpop.f32.mrf.mxu0
    %v863 = vadd.f32 %v84, %v862
    %864 = vdwg.mxu0
    %866 = vrot.lane.b32.xlu0 %v861, 32
    %v867 = vpop.permute.xlu0 %866
    %v869 = vadd.f32 %v861, %v867
    %v870 = vxor.u32 %v869, 2147483648
    %v871 = vmul.f32 %v870, 1.442695
    %v872 = vpow.pop %v871
    %v873 = vadd.f32 %v872, 1.0
    %v874 = vrcp.pop %v873
    %v875 = vmul.f32 1.0, %v874
    %877 = vrot.lane.b32.xlu0 %v863, 32
    %v878 = vpop.permute.xlu0 %877
    %v880 = vadd.f32 %v861, %v878
    %v881 = vxor.u32 %v880, 2147483648
    %v882 = vmul.f32 %v881, 1.442695
    %v883 = vpow.pop %v882
    %v884 = vadd.f32 %v883, 1.0
    %v885 = vrcp.pop %v884
    %v886 = vmul.f32 1.0, %v885
    %887 = vrot.lane.b32.xlu0 %v863, 96
    %v888 = vpop.permute.xlu0 %887
    %v890 = vmul.f32 %v875, %v888
    %892 = vrot.lane.b32.xlu0 %v890, 64
    %v893 = vpop.permute.xlu0 %892
    %v895 = vadd.f32 %v861, %v893
    %v896 = vtanh.pop %v895
    %v897 = vsub.f32 1.0, %v886
    %899 = vrot.lane.b32.xlu0 %v896, 96
    %v900 = vpop.permute.xlu0 %899
    %v902 = vmul.f32 %v897, %v900
    %v903 = vmul.f32 %v886, %v685
    %v904 = vadd.f32 %v902, %v903
    %s905 = scalar_lea.vmem [#allocation2], 24
    %v906 = vld [vmem:[%s905] sm:$0xff]
    %v907 = vsel %vm247, %v788, 0
    %909 = vmatprep.subr.mxu0 0.0
    %910 = vmatpush1.msra.mxu0 0.0
    %911 = vmatprep.subr.mxu0 0.0
    %912 = vmatpush1.msra.mxu0 0.0
    %913 = vmatprep.subr.mxu0 0.0
    %914 = vmatpush1.msra.mxu0 0.0
    %915 = vmatprep.subr.mxu0 0.0
    %916 = vmatpush1.msra.mxu0 0.0
    %917 = vmatprep.subr.mxu0 0.0
    %918 = vmatpush1.msra.mxu0 0.0
    %919 = vmatprep.subr.mxu0 0.0
    %920 = vmatpush1.msra.mxu0 0.0
    %921 = vmatprep.subr.mxu0 0.0
    %922 = vmatpush1.msra.mxu0 0.0
    %923 = vmatprep.subr.mxu0 0.0
    %924 = vmatpush1.msra.mxu0 0.0
    %925 = vmatprep.subr.mxu0 0.0
    %926 = vmatpush1.msra.mxu0 0.0
    %927 = vmatprep.subr.mxu0 0.0
    %928 = vmatpush1.msra.mxu0 0.0
    %929 = vmatprep.subr.mxu0 0.0
    %930 = vmatpush1.msra.mxu0 0.0
    %931 = vmatprep.subr.mxu0 0.0
    %932 = vmatpush1.msra.mxu0 0.0
    %933 = vmatprep.subr.mxu0 0.0
    %934 = vmatpush1.msra.mxu0 %v51
    %935 = vmatprep.subr.mxu0 0.0
    %936 = vmatpush1.msra.mxu0 %v50
    %937 = vmatprep.subr.mxu0 0.0
    %938 = vmatpush1.msra.mxu0 %v49
    %939 = vmatprep.subr.mxu0 0.0
    %940 = vmatpush1.msra.mxu0 %v48
    %941 = vmatprep.subr.mxu0 0.0
    %942 = vmatpush2.msra.mxu0 0.0
    %943 = vmatprep.subr.mxu0 0.0
    %944 = vmatpush2.msra.mxu0 0.0
    %945 = vmatprep.subr.mxu0 0.0
    %946 = vmatpush2.msra.mxu0 0.0
    %947 = vmatprep.subr.mxu0 0.0
    %948 = vmatpush2.msra.mxu0 0.0
    %949 = vmatprep.subr.mxu0 0.0
    %950 = vmatpush2.msra.mxu0 0.0
    %951 = vmatprep.subr.mxu0 0.0
    %952 = vmatpush2.msra.mxu0 0.0
    %953 = vmatprep.subr.mxu0 0.0
    %954 = vmatpush2.msra.mxu0 0.0
    %955 = vmatprep.subr.mxu0 0.0
    %956 = vmatpush2.msra.mxu0 0.0
    %957 = vmatprep.subr.mxu0 0.0
    %958 = vmatpush2.msra.mxu0 0.0
    %959 = vmatprep.subr.mxu0 0.0
    %960 = vmatpush2.msra.mxu0 0.0
    %961 = vmatprep.subr.mxu0 0.0
    %962 = vmatpush2.msra.mxu0 0.0
    %963 = vmatprep.subr.mxu0 0.0
    %964 = vmatpush2.msra.mxu0 0.0
    %965 = vmatprep.subr.mxu0 0.0
    %966 = vmatpush2.msra.mxu0 0.0
    %967 = vmatprep.subr.mxu0 0.0
    %968 = vmatpush2.msra.mxu0 0.0
    %969 = vmatprep.subr.mxu0 0.0
    %970 = vmatpush2.msra.mxu0 0.0
    %971 = vmatprep.subr.mxu0 0.0
    %972 = vmatpush2.msra.mxu0 0.0
    %973 = vmatprep.mubr.f32.mxu0 0.0
    %974 = vmatmul.mubr.f32.gmra.mxu0 %v907
    %v975 = vpop.f32.mrf.mxu0
    %v976 = vadd.f32 %v73, %v975
    %v977 = vpop.f32.mrf.mxu0
    %978 = vdwg.mxu0
    %v979 = vadd.f32 %v906, %v976
    %v980 = vxor.u32 %v979, 2147483648
    %v981 = vmul.f32 %v980, 1.442695
    %v982 = vpow.pop %v981
    %v983 = vadd.f32 %v982, 1.0
    %v984 = vrcp.pop %v983
    %v985 = vmul.f32 1.0, %v984
    %987 = vrot.lane.b32.xlu0 %v976, 64
    %v988 = vpop.permute.xlu0 %987
    %v990 = vmul.f32 %v985, %v988
    %992 = vrot.lane.b32.xlu0 %v990, 64
    %v993 = vpop.permute.xlu0 %992
    %v995 = vadd.f32 %v906, %v993
    %v996 = vtanh.pop %v995
    %v997 = vsub.f32 1.0, %v985
    %999 = vrot.lane.b32.xlu0 %v996, 96
    %v1000 = vpop.permute.xlu0 %999
    %v1002 = vmul.f32 %v997, %v1000
    %v1003 = vmul.f32 %v985, %v785
    %v1004 = vadd.f32 %v1002, %v1003
    %1006 = vrot.lane.b32.xlu0 %v1004, 96
    %v1007 = vpop.permute.xlu0 %1006
    %v1009 = vsel %vm247, %v1007, %v904
    %v1011 = vsel %vm352, %v1009, 0
    %1013 = vmatprep.subr.mxu0 0.0
    %1014 = vmatpush1.msra.mxu0 0.0
    %1015 = vmatprep.subr.mxu0 0.0
    %1016 = vmatpush1.msra.mxu0 0.0
    %1017 = vmatprep.subr.mxu0 0.0
    %1018 = vmatpush1.msra.mxu0 0.0
    %1019 = vmatprep.subr.mxu0 0.0
    %1020 = vmatpush1.msra.mxu0 0.0
    %1021 = vmatprep.subr.mxu0 0.0
    %1022 = vmatpush1.msra.mxu0 0.0
    %1023 = vmatprep.subr.mxu0 0.0
    %1024 = vmatpush1.msra.mxu0 0.0
    %1025 = vmatprep.subr.mxu0 0.0
    %1026 = vmatpush1.msra.mxu0 0.0
    %1027 = vmatprep.subr.mxu0 0.0
    %1028 = vmatpush1.msra.mxu0 0.0
    %1029 = vmatprep.subr.mxu0 %v67
    %1030 = vmatpush1.msra.mxu0 %v66
    %1031 = vmatprep.subr.mxu0 %v65
    %1032 = vmatpush1.msra.mxu0 %v64
    %1033 = vmatprep.subr.mxu0 %v63
    %1034 = vmatpush1.msra.mxu0 %v62
    %1035 = vmatprep.subr.mxu0 %v61
    %1036 = vmatpush1.msra.mxu0 %v60
    %1037 = vmatprep.subr.mxu0 %v59
    %1038 = vmatpush1.msra.mxu0 %v58
    %1039 = vmatprep.subr.mxu0 %v57
    %1040 = vmatpush1.msra.mxu0 %v56
    %1041 = vmatprep.subr.mxu0 %v55
    %1042 = vmatpush1.msra.mxu0 %v54
    %1043 = vmatprep.subr.mxu0 %v53
    %1044 = vmatpush1.msra.mxu0 %v52
    %1045 = vmatprep.subr.mxu0 0.0
    %1046 = vmatpush2.msra.mxu0 0.0
    %1047 = vmatprep.subr.mxu0 0.0
    %1048 = vmatpush2.msra.mxu0 0.0
    %1049 = vmatprep.subr.mxu0 0.0
    %1050 = vmatpush2.msra.mxu0 0.0
    %1051 = vmatprep.subr.mxu0 0.0
    %1052 = vmatpush2.msra.mxu0 0.0
    %1053 = vmatprep.subr.mxu0 0.0
    %1054 = vmatpush2.msra.mxu0 0.0
    %1055 = vmatprep.subr.mxu0 0.0
    %1056 = vmatpush2.msra.mxu0 0.0
    %1057 = vmatprep.subr.mxu0 0.0
    %1058 = vmatpush2.msra.mxu0 0.0
    %1059 = vmatprep.subr.mxu0 0.0
    %1060 = vmatpush2.msra.mxu0 0.0
    %1061 = vmatprep.subr.mxu0 0.0
    %1062 = vmatpush2.msra.mxu0 0.0
    %1063 = vmatprep.subr.mxu0 0.0
    %1064 = vmatpush2.msra.mxu0 0.0
    %1065 = vmatprep.subr.mxu0 0.0
    %1066 = vmatpush2.msra.mxu0 0.0
    %1067 = vmatprep.subr.mxu0 0.0
    %1068 = vmatpush2.msra.mxu0 0.0
    %1069 = vmatprep.subr.mxu0 0.0
    %1070 = vmatpush2.msra.mxu0 0.0
    %1071 = vmatprep.subr.mxu0 0.0
    %1072 = vmatpush2.msra.mxu0 0.0
    %1073 = vmatprep.subr.mxu0 0.0
    %1074 = vmatpush2.msra.mxu0 0.0
    %1075 = vmatprep.subr.mxu0 0.0
    %1076 = vmatpush2.msra.mxu0 0.0
    %1077 = vmatprep.mubr.f32.mxu0 0.0
    %1078 = vmatmul.mubr.f32.gmra.mxu0 %v1011
    %v1079 = vpop.f32.mrf.mxu0
    %v1080 = vadd.f32 %v80, %v1079
    %v1081 = vpop.f32.mrf.mxu0
    %v1082 = vadd.f32 %v84, %v1081
    %1083 = vdwg.mxu0
    %1085 = vrot.lane.b32.xlu0 %v1080, 32
    %v1086 = vpop.permute.xlu0 %1085
    %v1088 = vadd.f32 %v1080, %v1086
    %v1089 = vxor.u32 %v1088, 2147483648
    %v1090 = vmul.f32 %v1089, 1.442695
    %v1091 = vpow.pop %v1090
    %v1092 = vadd.f32 %v1091, 1.0
    %v1093 = vrcp.pop %v1092
    %v1094 = vmul.f32 1.0, %v1093
    %1096 = vrot.lane.b32.xlu0 %v1082, 32
    %v1097 = vpop.permute.xlu0 %1096
    %v1099 = vadd.f32 %v1080, %v1097
    %v1100 = vxor.u32 %v1099, 2147483648
    %v1101 = vmul.f32 %v1100, 1.442695
    %v1102 = vpow.pop %v1101
    %v1103 = vadd.f32 %v1102, 1.0
    %v1104 = vrcp.pop %v1103
    %v1105 = vmul.f32 1.0, %v1104
    %1106 = vrot.lane.b32.xlu0 %v1082, 96
    %v1107 = vpop.permute.xlu0 %1106
    %v1109 = vmul.f32 %v1094, %v1107
    %1111 = vrot.lane.b32.xlu0 %v1109, 64
    %v1112 = vpop.permute.xlu0 %1111
    %v1114 = vadd.f32 %v1080, %v1112
    %v1115 = vtanh.pop %v1114
    %v1116 = vsub.f32 1.0, %v1105
    %1118 = vrot.lane.b32.xlu0 %v1115, 96
    %v1119 = vpop.permute.xlu0 %1118
    %v1121 = vmul.f32 %v1116, %v1119
    %v1122 = vmul.f32 %v1105, %v904
    %v1123 = vadd.f32 %v1121, %v1122
    %s1124 = scalar_lea.vmem [#allocation2], 32
    %v1125 = vld [vmem:[%s1124] sm:$0xff]
    %v1126 = vsel %vm247, %v1007, 0
    %1128 = vmatprep.subr.mxu0 0.0
    %1129 = vmatpush1.msra.mxu0 0.0
    %1130 = vmatprep.subr.mxu0 0.0
    %1131 = vmatpush1.msra.mxu0 0.0
    %1132 = vmatprep.subr.mxu0 0.0
    %1133 = vmatpush1.msra.mxu0 0.0
    %1134 = vmatprep.subr.mxu0 0.0
    %1135 = vmatpush1.msra.mxu0 0.0
    %1136 = vmatprep.subr.mxu0 0.0
    %1137 = vmatpush1.msra.mxu0 0.0
    %1138 = vmatprep.subr.mxu0 0.0
    %1139 = vmatpush1.msra.mxu0 0.0
    %1140 = vmatprep.subr.mxu0 0.0
    %1141 = vmatpush1.msra.mxu0 0.0
    %1142 = vmatprep.subr.mxu0 0.0
    %1143 = vmatpush1.msra.mxu0 0.0
    %1144 = vmatprep.subr.mxu0 0.0
    %1145 = vmatpush1.msra.mxu0 0.0
    %1146 = vmatprep.subr.mxu0 0.0
    %1147 = vmatpush1.msra.mxu0 0.0
    %1148 = vmatprep.subr.mxu0 0.0
    %1149 = vmatpush1.msra.mxu0 0.0
    %1150 = vmatprep.subr.mxu0 0.0
    %1151 = vmatpush1.msra.mxu0 0.0
    %1152 = vmatprep.subr.mxu0 0.0
    %1153 = vmatpush1.msra.mxu0 %v51
    %1154 = vmatprep.subr.mxu0 0.0
    %1155 = vmatpush1.msra.mxu0 %v50
    %1156 = vmatprep.subr.mxu0 0.0
    %1157 = vmatpush1.msra.mxu0 %v49
    %1158 = vmatprep.subr.mxu0 0.0
    %1159 = vmatpush1.msra.mxu0 %v48
    %1160 = vmatprep.subr.mxu0 0.0
    %1161 = vmatpush2.msra.mxu0 0.0
    %1162 = vmatprep.subr.mxu0 0.0
    %1163 = vmatpush2.msra.mxu0 0.0
    %1164 = vmatprep.subr.mxu0 0.0
    %1165 = vmatpush2.msra.mxu0 0.0
    %1166 = vmatprep.subr.mxu0 0.0
    %1167 = vmatpush2.msra.mxu0 0.0
    %1168 = vmatprep.subr.mxu0 0.0
    %1169 = vmatpush2.msra.mxu0 0.0
    %1170 = vmatprep.subr.mxu0 0.0
    %1171 = vmatpush2.msra.mxu0 0.0
    %1172 = vmatprep.subr.mxu0 0.0
    %1173 = vmatpush2.msra.mxu0 0.0
    %1174 = vmatprep.subr.mxu0 0.0
    %1175 = vmatpush2.msra.mxu0 0.0
    %1176 = vmatprep.subr.mxu0 0.0
    %1177 = vmatpush2.msra.mxu0 0.0
    %1178 = vmatprep.subr.mxu0 0.0
    %1179 = vmatpush2.msra.mxu0 0.0
    %1180 = vmatprep.subr.mxu0 0.0
    %1181 = vmatpush2.msra.mxu0 0.0
    %1182 = vmatprep.subr.mxu0 0.0
    %1183 = vmatpush2.msra.mxu0 0.0
    %1184 = vmatprep.subr.mxu0 0.0
    %1185 = vmatpush2.msra.mxu0 0.0
    %1186 = vmatprep.subr.mxu0 0.0
    %1187 = vmatpush2.msra.mxu0 0.0
    %1188 = vmatprep.subr.mxu0 0.0
    %1189 = vmatpush2.msra.mxu0 0.0
    %1190 = vmatprep.subr.mxu0 0.0
    %1191 = vmatpush2.msra.mxu0 0.0
    %1192 = vmatprep.mubr.f32.mxu0 0.0
    %1193 = vmatmul.mubr.f32.gmra.mxu0 %v1126
    %v1194 = vpop.f32.mrf.mxu0
    %v1195 = vadd.f32 %v73, %v1194
    %v1196 = vpop.f32.mrf.mxu0
    %1197 = vdwg.mxu0
    %v1198 = vadd.f32 %v1125, %v1195
    %v1199 = vxor.u32 %v1198, 2147483648
    %v1200 = vmul.f32 %v1199, 1.442695
    %v1201 = vpow.pop %v1200
    %v1202 = vadd.f32 %v1201, 1.0
    %v1203 = vrcp.pop %v1202
    %v1204 = vmul.f32 1.0, %v1203
    %1206 = vrot.lane.b32.xlu0 %v1195, 64
    %v1207 = vpop.permute.xlu0 %1206
    %v1209 = vmul.f32 %v1204, %v1207
    %1211 = vrot.lane.b32.xlu0 %v1209, 64
    %v1212 = vpop.permute.xlu0 %1211
    %v1214 = vadd.f32 %v1125, %v1212
    %v1215 = vtanh.pop %v1214
    %v1216 = vsub.f32 1.0, %v1204
    %1218 = vrot.lane.b32.xlu0 %v1215, 96
    %v1219 = vpop.permute.xlu0 %1218
    %v1221 = vmul.f32 %v1216, %v1219
    %v1222 = vmul.f32 %v1204, %v1004
    %v1223 = vadd.f32 %v1221, %v1222
    %1225 = vrot.lane.b32.xlu0 %v1223, 96
    %v1226 = vpop.permute.xlu0 %1225
    %v1228 = vsel %vm247, %v1226, %v1123
    %v1230 = vsel %vm352, %v1228, 0
    %1232 = vmatprep.subr.mxu0 0.0
    %1233 = vmatpush1.msra.mxu0 0.0
    %1234 = vmatprep.subr.mxu0 0.0
    %1235 = vmatpush1.msra.mxu0 0.0
    %1236 = vmatprep.subr.mxu0 0.0
    %1237 = vmatpush1.msra.mxu0 0.0
    %1238 = vmatprep.subr.mxu0 0.0
    %1239 = vmatpush1.msra.mxu0 0.0
    %1240 = vmatprep.subr.mxu0 0.0
    %1241 = vmatpush1.msra.mxu0 0.0
    %1242 = vmatprep.subr.mxu0 0.0
    %1243 = vmatpush1.msra.mxu0 0.0
    %1244 = vmatprep.subr.mxu0 0.0
    %1245 = vmatpush1.msra.mxu0 0.0
    %1246 = vmatprep.subr.mxu0 0.0
    %1247 = vmatpush1.msra.mxu0 0.0
    %1248 = vmatprep.subr.mxu0 %v67
    %1249 = vmatpush1.msra.mxu0 %v66
    %1250 = vmatprep.subr.mxu0 %v65
    %1251 = vmatpush1.msra.mxu0 %v64
    %1252 = vmatprep.subr.mxu0 %v63
    %1253 = vmatpush1.msra.mxu0 %v62
    %1254 = vmatprep.subr.mxu0 %v61
    %1255 = vmatpush1.msra.mxu0 %v60
    %1256 = vmatprep.subr.mxu0 %v59
    %1257 = vmatpush1.msra.mxu0 %v58
    %1258 = vmatprep.subr.mxu0 %v57
    %1259 = vmatpush1.msra.mxu0 %v56
    %1260 = vmatprep.subr.mxu0 %v55
    %1261 = vmatpush1.msra.mxu0 %v54
    %1262 = vmatprep.subr.mxu0 %v53
    %1263 = vmatpush1.msra.mxu0 %v52
    %1264 = vmatprep.subr.mxu0 0.0
    %1265 = vmatpush2.msra.mxu0 0.0
    %1266 = vmatprep.subr.mxu0 0.0
    %1267 = vmatpush2.msra.mxu0 0.0
    %1268 = vmatprep.subr.mxu0 0.0
    %1269 = vmatpush2.msra.mxu0 0.0
    %1270 = vmatprep.subr.mxu0 0.0
    %1271 = vmatpush2.msra.mxu0 0.0
    %1272 = vmatprep.subr.mxu0 0.0
    %1273 = vmatpush2.msra.mxu0 0.0
    %1274 = vmatprep.subr.mxu0 0.0
    %1275 = vmatpush2.msra.mxu0 0.0
    %1276 = vmatprep.subr.mxu0 0.0
    %1277 = vmatpush2.msra.mxu0 0.0
    %1278 = vmatprep.subr.mxu0 0.0
    %1279 = vmatpush2.msra.mxu0 0.0
    %1280 = vmatprep.subr.mxu0 0.0
    %1281 = vmatpush2.msra.mxu0 0.0
    %1282 = vmatprep.subr.mxu0 0.0
    %1283 = vmatpush2.msra.mxu0 0.0
    %1284 = vmatprep.subr.mxu0 0.0
    %1285 = vmatpush2.msra.mxu0 0.0
    %1286 = vmatprep.subr.mxu0 0.0
    %1287 = vmatpush2.msra.mxu0 0.0
    %1288 = vmatprep.subr.mxu0 0.0
    %1289 = vmatpush2.msra.mxu0 0.0
    %1290 = vmatprep.subr.mxu0 0.0
    %1291 = vmatpush2.msra.mxu0 0.0
    %1292 = vmatprep.subr.mxu0 0.0
    %1293 = vmatpush2.msra.mxu0 0.0
    %1294 = vmatprep.subr.mxu0 0.0
    %1295 = vmatpush2.msra.mxu0 0.0
    %1296 = vmatprep.mubr.f32.mxu0 0.0
    %1297 = vmatmul.mubr.f32.gmra.mxu0 %v1230
    %v1298 = vpop.f32.mrf.mxu0
    %v1299 = vadd.f32 %v80, %v1298
    %v1300 = vpop.f32.mrf.mxu0
    %v1301 = vadd.f32 %v84, %v1300
    %1302 = vdwg.mxu0
    %1304 = vrot.lane.b32.xlu0 %v1299, 32
    %v1305 = vpop.permute.xlu0 %1304
    %v1307 = vadd.f32 %v1299, %v1305
    %v1308 = vxor.u32 %v1307, 2147483648
    %v1309 = vmul.f32 %v1308, 1.442695
    %v1310 = vpow.pop %v1309
    %v1311 = vadd.f32 %v1310, 1.0
    %v1312 = vrcp.pop %v1311
    %v1313 = vmul.f32 1.0, %v1312
    %1315 = vrot.lane.b32.xlu0 %v1301, 32
    %v1316 = vpop.permute.xlu0 %1315
    %v1318 = vadd.f32 %v1299, %v1316
    %v1319 = vxor.u32 %v1318, 2147483648
    %v1320 = vmul.f32 %v1319, 1.442695
    %v1321 = vpow.pop %v1320
    %v1322 = vadd.f32 %v1321, 1.0
    %v1323 = vrcp.pop %v1322
    %v1324 = vmul.f32 1.0, %v1323
    %1325 = vrot.lane.b32.xlu0 %v1301, 96
    %v1326 = vpop.permute.xlu0 %1325
    %v1328 = vmul.f32 %v1313, %v1326
    %1330 = vrot.lane.b32.xlu0 %v1328, 64
    %v1331 = vpop.permute.xlu0 %1330
    %v1333 = vadd.f32 %v1299, %v1331
    %v1334 = vtanh.pop %v1333
    %v1335 = vsub.f32 1.0, %v1324
    %1337 = vrot.lane.b32.xlu0 %v1334, 96
    %v1338 = vpop.permute.xlu0 %1337
    %v1340 = vmul.f32 %v1335, %v1338
    %v1341 = vmul.f32 %v1324, %v1123
    %v1342 = vadd.f32 %v1340, %v1341
    %s1343 = scalar_lea.vmem [#allocation2], 40
    %v1344 = vld [vmem:[%s1343] sm:$0xff]
    %v1345 = vsel %vm247, %v1226, 0
    %1347 = vmatprep.subr.mxu0 0.0
    %1348 = vmatpush1.msra.mxu0 0.0
    %1349 = vmatprep.subr.mxu0 0.0
    %1350 = vmatpush1.msra.mxu0 0.0
    %1351 = vmatprep.subr.mxu0 0.0
    %1352 = vmatpush1.msra.mxu0 0.0
    %1353 = vmatprep.subr.mxu0 0.0
    %1354 = vmatpush1.msra.mxu0 0.0
    %1355 = vmatprep.subr.mxu0 0.0
    %1356 = vmatpush1.msra.mxu0 0.0
    %1357 = vmatprep.subr.mxu0 0.0
    %1358 = vmatpush1.msra.mxu0 0.0
    %1359 = vmatprep.subr.mxu0 0.0
    %1360 = vmatpush1.msra.mxu0 0.0
    %1361 = vmatprep.subr.mxu0 0.0
    %1362 = vmatpush1.msra.mxu0 0.0
    %1363 = vmatprep.subr.mxu0 0.0
    %1364 = vmatpush1.msra.mxu0 0.0
    %1365 = vmatprep.subr.mxu0 0.0
    %1366 = vmatpush1.msra.mxu0 0.0
    %1367 = vmatprep.subr.mxu0 0.0
    %1368 = vmatpush1.msra.mxu0 0.0
    %1369 = vmatprep.subr.mxu0 0.0
    %1370 = vmatpush1.msra.mxu0 0.0
    %1371 = vmatprep.subr.mxu0 0.0
    %1372 = vmatpush1.msra.mxu0 %v51
    %1373 = vmatprep.subr.mxu0 0.0
    %1374 = vmatpush1.msra.mxu0 %v50
    %1375 = vmatprep.subr.mxu0 0.0
    %1376 = vmatpush1.msra.mxu0 %v49
    %1377 = vmatprep.subr.mxu0 0.0
    %1378 = vmatpush1.msra.mxu0 %v48
    %1379 = vmatprep.subr.mxu0 0.0
    %1380 = vmatpush2.msra.mxu0 0.0
    %1381 = vmatprep.subr.mxu0 0.0
    %1382 = vmatpush2.msra.mxu0 0.0
    %1383 = vmatprep.subr.mxu0 0.0
    %1384 = vmatpush2.msra.mxu0 0.0
    %1385 = vmatprep.subr.mxu0 0.0
    %1386 = vmatpush2.msra.mxu0 0.0
    %1387 = vmatprep.subr.mxu0 0.0
    %1388 = vmatpush2.msra.mxu0 0.0
    %1389 = vmatprep.subr.mxu0 0.0
    %1390 = vmatpush2.msra.mxu0 0.0
    %1391 = vmatprep.subr.mxu0 0.0
    %1392 = vmatpush2.msra.mxu0 0.0
    %1393 = vmatprep.subr.mxu0 0.0
    %1394 = vmatpush2.msra.mxu0 0.0
    %1395 = vmatprep.subr.mxu0 0.0
    %1396 = vmatpush2.msra.mxu0 0.0
    %1397 = vmatprep.subr.mxu0 0.0
    %1398 = vmatpush2.msra.mxu0 0.0
    %1399 = vmatprep.subr.mxu0 0.0
    %1400 = vmatpush2.msra.mxu0 0.0
    %1401 = vmatprep.subr.mxu0 0.0
    %1402 = vmatpush2.msra.mxu0 0.0
    %1403 = vmatprep.subr.mxu0 0.0
    %1404 = vmatpush2.msra.mxu0 0.0
    %1405 = vmatprep.subr.mxu0 0.0
    %1406 = vmatpush2.msra.mxu0 0.0
    %1407 = vmatprep.subr.mxu0 0.0
    %1408 = vmatpush2.msra.mxu0 0.0
    %1409 = vmatprep.subr.mxu0 0.0
    %1410 = vmatpush2.msra.mxu0 0.0
    %1411 = vmatprep.mubr.f32.mxu0 0.0
    %1412 = vmatmul.mubr.f32.gmra.mxu0 %v1345
    %v1413 = vpop.f32.mrf.mxu0
    %v1414 = vadd.f32 %v73, %v1413
    %v1415 = vpop.f32.mrf.mxu0
    %1416 = vdwg.mxu0
    %v1417 = vadd.f32 %v1344, %v1414
    %v1418 = vxor.u32 %v1417, 2147483648
    %v1419 = vmul.f32 %v1418, 1.442695
    %v1420 = vpow.pop %v1419
    %v1421 = vadd.f32 %v1420, 1.0
    %v1422 = vrcp.pop %v1421
    %v1423 = vmul.f32 1.0, %v1422
    %1425 = vrot.lane.b32.xlu0 %v1414, 64
    %v1426 = vpop.permute.xlu0 %1425
    %v1428 = vmul.f32 %v1423, %v1426
    %1430 = vrot.lane.b32.xlu0 %v1428, 64
    %v1431 = vpop.permute.xlu0 %1430
    %v1433 = vadd.f32 %v1344, %v1431
    %v1434 = vtanh.pop %v1433
    %v1435 = vsub.f32 1.0, %v1423
    %1437 = vrot.lane.b32.xlu0 %v1434, 96
    %v1438 = vpop.permute.xlu0 %1437
    %v1440 = vmul.f32 %v1435, %v1438
    %v1441 = vmul.f32 %v1423, %v1223
    %v1442 = vadd.f32 %v1440, %v1441
    %1444 = vrot.lane.b32.xlu0 %v1442, 96
    %v1445 = vpop.permute.xlu0 %1444
    %v1447 = vsel %vm247, %v1445, %v1342
    %v1449 = vsel %vm352, %v1447, 0
    %1451 = vmatprep.subr.mxu0 0.0
    %1452 = vmatpush1.msra.mxu0 0.0
    %1453 = vmatprep.subr.mxu0 0.0
    %1454 = vmatpush1.msra.mxu0 0.0
    %1455 = vmatprep.subr.mxu0 0.0
    %1456 = vmatpush1.msra.mxu0 0.0
    %1457 = vmatprep.subr.mxu0 0.0
    %1458 = vmatpush1.msra.mxu0 0.0
    %1459 = vmatprep.subr.mxu0 0.0
    %1460 = vmatpush1.msra.mxu0 0.0
    %1461 = vmatprep.subr.mxu0 0.0
    %1462 = vmatpush1.msra.mxu0 0.0
    %1463 = vmatprep.subr.mxu0 0.0
    %1464 = vmatpush1.msra.mxu0 0.0
    %1465 = vmatprep.subr.mxu0 0.0
    %1466 = vmatpush1.msra.mxu0 0.0
    %1467 = vmatprep.subr.mxu0 %v67
    %1468 = vmatpush1.msra.mxu0 %v66
    %1469 = vmatprep.subr.mxu0 %v65
    %1470 = vmatpush1.msra.mxu0 %v64
    %1471 = vmatprep.subr.mxu0 %v63
    %1472 = vmatpush1.msra.mxu0 %v62
    %1473 = vmatprep.subr.mxu0 %v61
    %1474 = vmatpush1.msra.mxu0 %v60
    %1475 = vmatprep.subr.mxu0 %v59
    %1476 = vmatpush1.msra.mxu0 %v58
    %1477 = vmatprep.subr.mxu0 %v57
    %1478 = vmatpush1.msra.mxu0 %v56
    %1479 = vmatprep.subr.mxu0 %v55
    %1480 = vmatpush1.msra.mxu0 %v54
    %1481 = vmatprep.subr.mxu0 %v53
    %1482 = vmatpush1.msra.mxu0 %v52
    %1483 = vmatprep.subr.mxu0 0.0
    %1484 = vmatpush2.msra.mxu0 0.0
    %1485 = vmatprep.subr.mxu0 0.0
    %1486 = vmatpush2.msra.mxu0 0.0
    %1487 = vmatprep.subr.mxu0 0.0
    %1488 = vmatpush2.msra.mxu0 0.0
    %1489 = vmatprep.subr.mxu0 0.0
    %1490 = vmatpush2.msra.mxu0 0.0
    %1491 = vmatprep.subr.mxu0 0.0
    %1492 = vmatpush2.msra.mxu0 0.0
    %1493 = vmatprep.subr.mxu0 0.0
    %1494 = vmatpush2.msra.mxu0 0.0
    %1495 = vmatprep.subr.mxu0 0.0
    %1496 = vmatpush2.msra.mxu0 0.0
    %1497 = vmatprep.subr.mxu0 0.0
    %1498 = vmatpush2.msra.mxu0 0.0
    %1499 = vmatprep.subr.mxu0 0.0
    %1500 = vmatpush2.msra.mxu0 0.0
    %1501 = vmatprep.subr.mxu0 0.0
    %1502 = vmatpush2.msra.mxu0 0.0
    %1503 = vmatprep.subr.mxu0 0.0
    %1504 = vmatpush2.msra.mxu0 0.0
    %1505 = vmatprep.subr.mxu0 0.0
    %1506 = vmatpush2.msra.mxu0 0.0
    %1507 = vmatprep.subr.mxu0 0.0
    %1508 = vmatpush2.msra.mxu0 0.0
    %1509 = vmatprep.subr.mxu0 0.0
    %1510 = vmatpush2.msra.mxu0 0.0
    %1511 = vmatprep.subr.mxu0 0.0
    %1512 = vmatpush2.msra.mxu0 0.0
    %1513 = vmatprep.subr.mxu0 0.0
    %1514 = vmatpush2.msra.mxu0 0.0
    %1515 = vmatprep.mubr.f32.mxu0 0.0
    %1516 = vmatmul.mubr.f32.gmra.mxu0 %v1449
    %v1517 = vpop.f32.mrf.mxu0
    %v1518 = vadd.f32 %v80, %v1517
    %v1519 = vpop.f32.mrf.mxu0
    %v1520 = vadd.f32 %v84, %v1519
    %1521 = vdwg.mxu0
    %1523 = vrot.lane.b32.xlu0 %v1518, 32
    %v1524 = vpop.permute.xlu0 %1523
    %v1526 = vadd.f32 %v1518, %v1524
    %v1527 = vxor.u32 %v1526, 2147483648
    %v1528 = vmul.f32 %v1527, 1.442695
    %v1529 = vpow.pop %v1528
    %v1530 = vadd.f32 %v1529, 1.0
    %v1531 = vrcp.pop %v1530
    %v1532 = vmul.f32 1.0, %v1531
    %1534 = vrot.lane.b32.xlu0 %v1520, 32
    %v1535 = vpop.permute.xlu0 %1534
    %v1537 = vadd.f32 %v1518, %v1535
    %v1538 = vxor.u32 %v1537, 2147483648
    %v1539 = vmul.f32 %v1538, 1.442695
    %v1540 = vpow.pop %v1539
    %v1541 = vadd.f32 %v1540, 1.0
    %v1542 = vrcp.pop %v1541
    %v1543 = vmul.f32 1.0, %v1542
    %1544 = vrot.lane.b32.xlu0 %v1520, 96
    %v1545 = vpop.permute.xlu0 %1544
    %v1547 = vmul.f32 %v1532, %v1545
    %1549 = vrot.lane.b32.xlu0 %v1547, 64
    %v1550 = vpop.permute.xlu0 %1549
    %v1552 = vadd.f32 %v1518, %v1550
    %v1553 = vtanh.pop %v1552
    %v1554 = vsub.f32 1.0, %v1543
    %1556 = vrot.lane.b32.xlu0 %v1553, 96
    %v1557 = vpop.permute.xlu0 %1556
    %v1559 = vmul.f32 %v1554, %v1557
    %v1560 = vmul.f32 %v1543, %v1342
    %v1561 = vadd.f32 %v1559, %v1560
    %s1562 = scalar_lea.vmem [#allocation2], 48
    %v1563 = vld [vmem:[%s1562] sm:$0xff]
    %v1564 = vsel %vm247, %v1445, 0
    %1566 = vmatprep.subr.mxu0 0.0
    %1567 = vmatpush1.msra.mxu0 0.0
    %1568 = vmatprep.subr.mxu0 0.0
    %1569 = vmatpush1.msra.mxu0 0.0
    %1570 = vmatprep.subr.mxu0 0.0
    %1571 = vmatpush1.msra.mxu0 0.0
    %1572 = vmatprep.subr.mxu0 0.0
    %1573 = vmatpush1.msra.mxu0 0.0
    %1574 = vmatprep.subr.mxu0 0.0
    %1575 = vmatpush1.msra.mxu0 0.0
    %1576 = vmatprep.subr.mxu0 0.0
    %1577 = vmatpush1.msra.mxu0 0.0
    %1578 = vmatprep.subr.mxu0 0.0
    %1579 = vmatpush1.msra.mxu0 0.0
    %1580 = vmatprep.subr.mxu0 0.0
    %1581 = vmatpush1.msra.mxu0 0.0
    %1582 = vmatprep.subr.mxu0 0.0
    %1583 = vmatpush1.msra.mxu0 0.0
    %1584 = vmatprep.subr.mxu0 0.0
    %1585 = vmatpush1.msra.mxu0 0.0
    %1586 = vmatprep.subr.mxu0 0.0
    %1587 = vmatpush1.msra.mxu0 0.0
    %1588 = vmatprep.subr.mxu0 0.0
    %1589 = vmatpush1.msra.mxu0 0.0
    %1590 = vmatprep.subr.mxu0 0.0
    %1591 = vmatpush1.msra.mxu0 %v51
    %1592 = vmatprep.subr.mxu0 0.0
    %1593 = vmatpush1.msra.mxu0 %v50
    %1594 = vmatprep.subr.mxu0 0.0
    %1595 = vmatpush1.msra.mxu0 %v49
    %1596 = vmatprep.subr.mxu0 0.0
    %1597 = vmatpush1.msra.mxu0 %v48
    %1598 = vmatprep.subr.mxu0 0.0
    %1599 = vmatpush2.msra.mxu0 0.0
    %1600 = vmatprep.subr.mxu0 0.0
    %1601 = vmatpush2.msra.mxu0 0.0
    %1602 = vmatprep.subr.mxu0 0.0
    %1603 = vmatpush2.msra.mxu0 0.0
    %1604 = vmatprep.subr.mxu0 0.0
    %1605 = vmatpush2.msra.mxu0 0.0
    %1606 = vmatprep.subr.mxu0 0.0
    %1607 = vmatpush2.msra.mxu0 0.0
    %1608 = vmatprep.subr.mxu0 0.0
    %1609 = vmatpush2.msra.mxu0 0.0
    %1610 = vmatprep.subr.mxu0 0.0
    %1611 = vmatpush2.msra.mxu0 0.0
    %1612 = vmatprep.subr.mxu0 0.0
    %1613 = vmatpush2.msra.mxu0 0.0
    %1614 = vmatprep.subr.mxu0 0.0
    %1615 = vmatpush2.msra.mxu0 0.0
    %1616 = vmatprep.subr.mxu0 0.0
    %1617 = vmatpush2.msra.mxu0 0.0
    %1618 = vmatprep.subr.mxu0 0.0
    %1619 = vmatpush2.msra.mxu0 0.0
    %1620 = vmatprep.subr.mxu0 0.0
    %1621 = vmatpush2.msra.mxu0 0.0
    %1622 = vmatprep.subr.mxu0 0.0
    %1623 = vmatpush2.msra.mxu0 0.0
    %1624 = vmatprep.subr.mxu0 0.0
    %1625 = vmatpush2.msra.mxu0 0.0
    %1626 = vmatprep.subr.mxu0 0.0
    %1627 = vmatpush2.msra.mxu0 0.0
    %1628 = vmatprep.subr.mxu0 0.0
    %1629 = vmatpush2.msra.mxu0 0.0
    %1630 = vmatprep.mubr.f32.mxu0 0.0
    %1631 = vmatmul.mubr.f32.gmra.mxu0 %v1564
    %v1632 = vpop.f32.mrf.mxu0
    %v1633 = vadd.f32 %v73, %v1632
    %v1634 = vpop.f32.mrf.mxu0
    %1635 = vdwg.mxu0
    %v1636 = vadd.f32 %v1563, %v1633
    %v1637 = vxor.u32 %v1636, 2147483648
    %v1638 = vmul.f32 %v1637, 1.442695
    %v1639 = vpow.pop %v1638
    %v1640 = vadd.f32 %v1639, 1.0
    %v1641 = vrcp.pop %v1640
    %v1642 = vmul.f32 1.0, %v1641
    %1644 = vrot.lane.b32.xlu0 %v1633, 64
    %v1645 = vpop.permute.xlu0 %1644
    %v1647 = vmul.f32 %v1642, %v1645
    %1649 = vrot.lane.b32.xlu0 %v1647, 64
    %v1650 = vpop.permute.xlu0 %1649
    %v1652 = vadd.f32 %v1563, %v1650
    %v1653 = vtanh.pop %v1652
    %v1654 = vsub.f32 1.0, %v1642
    %1656 = vrot.lane.b32.xlu0 %v1653, 96
    %v1657 = vpop.permute.xlu0 %1656
    %v1659 = vmul.f32 %v1654, %v1657
    %v1660 = vmul.f32 %v1642, %v1442
    %v1661 = vadd.f32 %v1659, %v1660
    %1663 = vrot.lane.b32.xlu0 %v1661, 96
    %v1664 = vpop.permute.xlu0 %1663
    %v1666 = vsel %vm247, %v1664, %v1561
    %v1668 = vsel %vm352, %v1666, 0
    %1670 = vmatprep.subr.mxu0 0.0
    %1671 = vmatpush1.msra.mxu0 0.0
    %1672 = vmatprep.subr.mxu0 0.0
    %1673 = vmatpush1.msra.mxu0 0.0
    %1674 = vmatprep.subr.mxu0 0.0
    %1675 = vmatpush1.msra.mxu0 0.0
    %1676 = vmatprep.subr.mxu0 0.0
    %1677 = vmatpush1.msra.mxu0 0.0
    %1678 = vmatprep.subr.mxu0 0.0
    %1679 = vmatpush1.msra.mxu0 0.0
    %1680 = vmatprep.subr.mxu0 0.0
    %1681 = vmatpush1.msra.mxu0 0.0
    %1682 = vmatprep.subr.mxu0 0.0
    %1683 = vmatpush1.msra.mxu0 0.0
    %1684 = vmatprep.subr.mxu0 0.0
    %1685 = vmatpush1.msra.mxu0 0.0
    %1686 = vmatprep.subr.mxu0 %v67
    %1687 = vmatpush1.msra.mxu0 %v66
    %1688 = vmatprep.subr.mxu0 %v65
    %1689 = vmatpush1.msra.mxu0 %v64
    %1690 = vmatprep.subr.mxu0 %v63
    %1691 = vmatpush1.msra.mxu0 %v62
    %1692 = vmatprep.subr.mxu0 %v61
    %1693 = vmatpush1.msra.mxu0 %v60
    %1694 = vmatprep.subr.mxu0 %v59
    %1695 = vmatpush1.msra.mxu0 %v58
    %1696 = vmatprep.subr.mxu0 %v57
    %1697 = vmatpush1.msra.mxu0 %v56
    %1698 = vmatprep.subr.mxu0 %v55
    %1699 = vmatpush1.msra.mxu0 %v54
    %1700 = vmatprep.subr.mxu0 %v53
    %1701 = vmatpush1.msra.mxu0 %v52
    %1702 = vmatprep.subr.mxu0 0.0
    %1703 = vmatpush2.msra.mxu0 0.0
    %1704 = vmatprep.subr.mxu0 0.0
    %1705 = vmatpush2.msra.mxu0 0.0
    %1706 = vmatprep.subr.mxu0 0.0
    %1707 = vmatpush2.msra.mxu0 0.0
    %1708 = vmatprep.subr.mxu0 0.0
    %1709 = vmatpush2.msra.mxu0 0.0
    %1710 = vmatprep.subr.mxu0 0.0
    %1711 = vmatpush2.msra.mxu0 0.0
    %1712 = vmatprep.subr.mxu0 0.0
    %1713 = vmatpush2.msra.mxu0 0.0
    %1714 = vmatprep.subr.mxu0 0.0
    %1715 = vmatpush2.msra.mxu0 0.0
    %1716 = vmatprep.subr.mxu0 0.0
    %1717 = vmatpush2.msra.mxu0 0.0
    %1718 = vmatprep.subr.mxu0 0.0
    %1719 = vmatpush2.msra.mxu0 0.0
    %1720 = vmatprep.subr.mxu0 0.0
    %1721 = vmatpush2.msra.mxu0 0.0
    %1722 = vmatprep.subr.mxu0 0.0
    %1723 = vmatpush2.msra.mxu0 0.0
    %1724 = vmatprep.subr.mxu0 0.0
    %1725 = vmatpush2.msra.mxu0 0.0
    %1726 = vmatprep.subr.mxu0 0.0
    %1727 = vmatpush2.msra.mxu0 0.0
    %1728 = vmatprep.subr.mxu0 0.0
    %1729 = vmatpush2.msra.mxu0 0.0
    %1730 = vmatprep.subr.mxu0 0.0
    %1731 = vmatpush2.msra.mxu0 0.0
    %1732 = vmatprep.subr.mxu0 0.0
    %1733 = vmatpush2.msra.mxu0 0.0
    %1734 = vmatprep.mubr.f32.mxu0 0.0
    %1735 = vmatmul.mubr.f32.gmra.mxu0 %v1668
    %v1736 = vpop.f32.mrf.mxu0
    %v1737 = vadd.f32 %v80, %v1736
    %v1738 = vpop.f32.mrf.mxu0
    %v1739 = vadd.f32 %v84, %v1738
    %1740 = vdwg.mxu0
    %1742 = vrot.lane.b32.xlu0 %v1737, 32
    %v1743 = vpop.permute.xlu0 %1742
    %v1745 = vadd.f32 %v1737, %v1743
    %v1746 = vxor.u32 %v1745, 2147483648
    %v1747 = vmul.f32 %v1746, 1.442695
    %v1748 = vpow.pop %v1747
    %v1749 = vadd.f32 %v1748, 1.0
    %v1750 = vrcp.pop %v1749
    %v1751 = vmul.f32 1.0, %v1750
    %1753 = vrot.lane.b32.xlu0 %v1739, 32
    %v1754 = vpop.permute.xlu0 %1753
    %v1756 = vadd.f32 %v1737, %v1754
    %v1757 = vxor.u32 %v1756, 2147483648
    %v1758 = vmul.f32 %v1757, 1.442695
    %v1759 = vpow.pop %v1758
    %v1760 = vadd.f32 %v1759, 1.0
    %v1761 = vrcp.pop %v1760
    %v1762 = vmul.f32 1.0, %v1761
    %1763 = vrot.lane.b32.xlu0 %v1739, 96
    %v1764 = vpop.permute.xlu0 %1763
    %v1766 = vmul.f32 %v1751, %v1764
    %1768 = vrot.lane.b32.xlu0 %v1766, 64
    %v1769 = vpop.permute.xlu0 %1768
    %v1771 = vadd.f32 %v1737, %v1769
    %v1772 = vtanh.pop %v1771
    %v1773 = vsub.f32 1.0, %v1762
    %1775 = vrot.lane.b32.xlu0 %v1772, 96
    %v1776 = vpop.permute.xlu0 %1775
    %v1778 = vmul.f32 %v1773, %v1776
    %v1779 = vmul.f32 %v1762, %v1561
    %v1780 = vadd.f32 %v1778, %v1779
    %s1781 = scalar_lea.vmem [#allocation2], 56
    %v1782 = vld [vmem:[%s1781] sm:$0xff]
    %v1783 = vsel %vm247, %v1664, 0
    %1785 = vmatprep.subr.mxu0 0.0
    %1786 = vmatpush1.msra.mxu0 0.0
    %1787 = vmatprep.subr.mxu0 0.0
    %1788 = vmatpush1.msra.mxu0 0.0
    %1789 = vmatprep.subr.mxu0 0.0
    %1790 = vmatpush1.msra.mxu0 0.0
    %1791 = vmatprep.subr.mxu0 0.0
    %1792 = vmatpush1.msra.mxu0 0.0
    %1793 = vmatprep.subr.mxu0 0.0
    %1794 = vmatpush1.msra.mxu0 0.0
    %1795 = vmatprep.subr.mxu0 0.0
    %1796 = vmatpush1.msra.mxu0 0.0
    %1797 = vmatprep.subr.mxu0 0.0
    %1798 = vmatpush1.msra.mxu0 0.0
    %1799 = vmatprep.subr.mxu0 0.0
    %1800 = vmatpush1.msra.mxu0 0.0
    %1801 = vmatprep.subr.mxu0 0.0
    %1802 = vmatpush1.msra.mxu0 0.0
    %1803 = vmatprep.subr.mxu0 0.0
    %1804 = vmatpush1.msra.mxu0 0.0
    %1805 = vmatprep.subr.mxu0 0.0
    %1806 = vmatpush1.msra.mxu0 0.0
    %1807 = vmatprep.subr.mxu0 0.0
    %1808 = vmatpush1.msra.mxu0 0.0
    %1809 = vmatprep.subr.mxu0 0.0
    %1810 = vmatpush1.msra.mxu0 %v51
    %1811 = vmatprep.subr.mxu0 0.0
    %1812 = vmatpush1.msra.mxu0 %v50
    %1813 = vmatprep.subr.mxu0 0.0
    %1814 = vmatpush1.msra.mxu0 %v49
    %1815 = vmatprep.subr.mxu0 0.0
    %1816 = vmatpush1.msra.mxu0 %v48
    %1817 = vmatprep.subr.mxu0 0.0
    %1818 = vmatpush2.msra.mxu0 0.0
    %1819 = vmatprep.subr.mxu0 0.0
    %1820 = vmatpush2.msra.mxu0 0.0
    %1821 = vmatprep.subr.mxu0 0.0
    %1822 = vmatpush2.msra.mxu0 0.0
    %1823 = vmatprep.subr.mxu0 0.0
    %1824 = vmatpush2.msra.mxu0 0.0
    %1825 = vmatprep.subr.mxu0 0.0
    %1826 = vmatpush2.msra.mxu0 0.0
    %1827 = vmatprep.subr.mxu0 0.0
    %1828 = vmatpush2.msra.mxu0 0.0
    %1829 = vmatprep.subr.mxu0 0.0
    %1830 = vmatpush2.msra.mxu0 0.0
    %1831 = vmatprep.subr.mxu0 0.0
    %1832 = vmatpush2.msra.mxu0 0.0
    %1833 = vmatprep.subr.mxu0 0.0
    %1834 = vmatpush2.msra.mxu0 0.0
    %1835 = vmatprep.subr.mxu0 0.0
    %1836 = vmatpush2.msra.mxu0 0.0
    %1837 = vmatprep.subr.mxu0 0.0
    %1838 = vmatpush2.msra.mxu0 0.0
    %1839 = vmatprep.subr.mxu0 0.0
    %1840 = vmatpush2.msra.mxu0 0.0
    %1841 = vmatprep.subr.mxu0 0.0
    %1842 = vmatpush2.msra.mxu0 0.0
    %1843 = vmatprep.subr.mxu0 0.0
    %1844 = vmatpush2.msra.mxu0 0.0
    %1845 = vmatprep.subr.mxu0 0.0
    %1846 = vmatpush2.msra.mxu0 0.0
    %1847 = vmatprep.subr.mxu0 0.0
    %1848 = vmatpush2.msra.mxu0 0.0
    %1849 = vmatprep.mubr.f32.mxu0 0.0
    %1850 = vmatmul.mubr.f32.gmra.mxu0 %v1783
    %v1851 = vpop.f32.mrf.mxu0
    %v1852 = vadd.f32 %v73, %v1851
    %v1853 = vpop.f32.mrf.mxu0
    %1854 = vdwg.mxu0
    %v1855 = vadd.f32 %v1782, %v1852
    %v1856 = vxor.u32 %v1855, 2147483648
    %v1857 = vmul.f32 %v1856, 1.442695
    %v1858 = vpow.pop %v1857
    %v1859 = vadd.f32 %v1858, 1.0
    %v1860 = vrcp.pop %v1859
    %v1861 = vmul.f32 1.0, %v1860
    %1863 = vrot.lane.b32.xlu0 %v1852, 64
    %v1864 = vpop.permute.xlu0 %1863
    %v1866 = vmul.f32 %v1861, %v1864
    %1868 = vrot.lane.b32.xlu0 %v1866, 64
    %v1869 = vpop.permute.xlu0 %1868
    %v1871 = vadd.f32 %v1782, %v1869
    %v1872 = vtanh.pop %v1871
    %v1873 = vsub.f32 1.0, %v1861
    %1875 = vrot.lane.b32.xlu0 %v1872, 96
    %v1876 = vpop.permute.xlu0 %1875
    %v1878 = vmul.f32 %v1873, %v1876
    %v1879 = vmul.f32 %v1861, %v1661
    %v1880 = vadd.f32 %v1878, %v1879
    %1882 = vrot.lane.b32.xlu0 %v1880, 96
    %v1883 = vpop.permute.xlu0 %1882
    %v1885 = vsel %vm247, %v1883, %v1780
    %v1887 = vsel %vm352, %v1885, 0
    %1889 = vmatprep.subr.mxu0 0.0
    %1890 = vmatpush1.msra.mxu0 0.0
    %1891 = vmatprep.subr.mxu0 0.0
    %1892 = vmatpush1.msra.mxu0 0.0
    %1893 = vmatprep.subr.mxu0 0.0
    %1894 = vmatpush1.msra.mxu0 0.0
    %1895 = vmatprep.subr.mxu0 0.0
    %1896 = vmatpush1.msra.mxu0 0.0
    %1897 = vmatprep.subr.mxu0 0.0
    %1898 = vmatpush1.msra.mxu0 0.0
    %1899 = vmatprep.subr.mxu0 0.0
    %1900 = vmatpush1.msra.mxu0 0.0
    %1901 = vmatprep.subr.mxu0 0.0
    %1902 = vmatpush1.msra.mxu0 0.0
    %1903 = vmatprep.subr.mxu0 0.0
    %1904 = vmatpush1.msra.mxu0 0.0
    %1905 = vmatprep.subr.mxu0 %v67
    %1906 = vmatpush1.msra.mxu0 %v66
    %1907 = vmatprep.subr.mxu0 %v65
    %1908 = vmatpush1.msra.mxu0 %v64
    %1909 = vmatprep.subr.mxu0 %v63
    %1910 = vmatpush1.msra.mxu0 %v62
    %1911 = vmatprep.subr.mxu0 %v61
    %1912 = vmatpush1.msra.mxu0 %v60
    %1913 = vmatprep.subr.mxu0 %v59
    %1914 = vmatpush1.msra.mxu0 %v58
    %1915 = vmatprep.subr.mxu0 %v57
    %1916 = vmatpush1.msra.mxu0 %v56
    %1917 = vmatprep.subr.mxu0 %v55
    %1918 = vmatpush1.msra.mxu0 %v54
    %1919 = vmatprep.subr.mxu0 %v53
    %1920 = vmatpush1.msra.mxu0 %v52
    %1921 = vmatprep.subr.mxu0 0.0
    %1922 = vmatpush2.msra.mxu0 0.0
    %1923 = vmatprep.subr.mxu0 0.0
    %1924 = vmatpush2.msra.mxu0 0.0
    %1925 = vmatprep.subr.mxu0 0.0
    %1926 = vmatpush2.msra.mxu0 0.0
    %1927 = vmatprep.subr.mxu0 0.0
    %1928 = vmatpush2.msra.mxu0 0.0
    %1929 = vmatprep.subr.mxu0 0.0
    %1930 = vmatpush2.msra.mxu0 0.0
    %1931 = vmatprep.subr.mxu0 0.0
    %1932 = vmatpush2.msra.mxu0 0.0
    %1933 = vmatprep.subr.mxu0 0.0
    %1934 = vmatpush2.msra.mxu0 0.0
    %1935 = vmatprep.subr.mxu0 0.0
    %1936 = vmatpush2.msra.mxu0 0.0
    %1937 = vmatprep.subr.mxu0 0.0
    %1938 = vmatpush2.msra.mxu0 0.0
    %1939 = vmatprep.subr.mxu0 0.0
    %1940 = vmatpush2.msra.mxu0 0.0
    %1941 = vmatprep.subr.mxu0 0.0
    %1942 = vmatpush2.msra.mxu0 0.0
    %1943 = vmatprep.subr.mxu0 0.0
    %1944 = vmatpush2.msra.mxu0 0.0
    %1945 = vmatprep.subr.mxu0 0.0
    %1946 = vmatpush2.msra.mxu0 0.0
    %1947 = vmatprep.subr.mxu0 0.0
    %1948 = vmatpush2.msra.mxu0 0.0
    %1949 = vmatprep.subr.mxu0 0.0
    %1950 = vmatpush2.msra.mxu0 0.0
    %1951 = vmatprep.subr.mxu0 0.0
    %1952 = vmatpush2.msra.mxu0 0.0
    %1953 = vmatprep.mubr.f32.mxu0 0.0
    %1954 = vmatmul.mubr.f32.gmra.mxu0 %v1887
    %v1955 = vpop.f32.mrf.mxu0
    %v1956 = vadd.f32 %v80, %v1955
    %v1957 = vpop.f32.mrf.mxu0
    %v1958 = vadd.f32 %v84, %v1957
    %1959 = vdwg.mxu0
    %1961 = vrot.lane.b32.xlu0 %v1956, 32
    %v1962 = vpop.permute.xlu0 %1961
    %v1964 = vadd.f32 %v1956, %v1962
    %v1965 = vxor.u32 %v1964, 2147483648
    %v1966 = vmul.f32 %v1965, 1.442695
    %v1967 = vpow.pop %v1966
    %v1968 = vadd.f32 %v1967, 1.0
    %v1969 = vrcp.pop %v1968
    %v1970 = vmul.f32 1.0, %v1969
    %1972 = vrot.lane.b32.xlu0 %v1958, 32
    %v1973 = vpop.permute.xlu0 %1972
    %v1975 = vadd.f32 %v1956, %v1973
    %v1976 = vxor.u32 %v1975, 2147483648
    %v1977 = vmul.f32 %v1976, 1.442695
    %v1978 = vpow.pop %v1977
    %v1979 = vadd.f32 %v1978, 1.0
    %v1980 = vrcp.pop %v1979
    %v1981 = vmul.f32 1.0, %v1980
    %1982 = vrot.lane.b32.xlu0 %v1958, 96
    %v1983 = vpop.permute.xlu0 %1982
    %v1985 = vmul.f32 %v1970, %v1983
    %1987 = vrot.lane.b32.xlu0 %v1985, 64
    %v1988 = vpop.permute.xlu0 %1987
    %v1990 = vadd.f32 %v1956, %v1988
    %v1991 = vtanh.pop %v1990
    %v1992 = vsub.f32 1.0, %v1981
    %1994 = vrot.lane.b32.xlu0 %v1991, 96
    %v1995 = vpop.permute.xlu0 %1994
    %v1997 = vmul.f32 %v1992, %v1995
    %v1998 = vmul.f32 %v1981, %v1780
    %v1999 = vadd.f32 %v1997, %v1998
    %v2000 = vld [vmem:[%s7] sm:$0x1]
    %v2002 = vlaneseq
    %v2003 = vshrl.u32 %v2002, 7
    %v2004 = vsub.s32 0, %v2003
    %v2005 = vrot.slane %v2000, %v2004
    %2006 = vrot.lane.b32.xlu0 %v2005, 32
    %v2007 = vpop.permute.xlu0 %2006
    %v2009 = vmul.f32 %v1999, %v2007
    %2011 = vrot.lane.b32.xlu0 %v2009, 96
    %v2012 = vpop.permute.xlu0 %2011
    %v2014 = vsel %vm247, %v2012, 0.0
    %2015 = vadd.xlane.f32.xlu0 %v2014
    %v2016 = vpop.xlane.xlu0 %2015
    %v2017 = vld [vmem:[#allocation3] sm:$0x1]
    %v2019 = vlaneseq
    %v2020 = vshrl.u32 %v2019, 7
    %v2021 = vsub.s32 0, %v2020
    %v2022 = vrot.slane %v2017, %v2021
    %v2024 = vadd.f32 %v2016, %v2022
    %2025 = vst.msk [vmem:[%s9] sm:$0xff] %vm103, %v2024
    // Predicated region
    $region42: #{tpu_custom_call.1} parent=1 // pred_check
      _
    $region43: #{tpu_custom_call.1} parent=1 // pred_check_branch
      %2027 = sbr.rel (0) target = $region45
    $region44: #{tpu_custom_call.1} parent=1 // pred_region
      _
    $region45: #{tpu_custom_call.1} parent=1 // pred_fallthru
      _
    // Predicated region
    $region46: #{tpu_custom_call.1} parent=1 // pred_check
      _
    $region47: #{tpu_custom_call.1} parent=1 // pred_check_branch
      %2029 = sbr.rel (0) target = $region49
    $region48: #{tpu_custom_call.1} parent=1 // pred_region
      _
    $region49: #{tpu_custom_call.1} parent=1 // pred_fallthru
      _
    %2030 = vsyncpa [#allocation5], 1

</llo_original>
